<compile_context>
chip_gen: v7x
topology: tpu7x:2x2x1
jax: 0.10.0
libtpu: 0.0.40
codegen_flags: <defaults>
</compile_context>

<pallas_src>
import math
import numpy as np
import jax
import jax.numpy as jnp
from jax.experimental import pallas as pl
from jax.experimental.pallas import tpu as pltpu


def _round_up(x, m):
    return ((x + m - 1) // m) * m


# ----------------------------------------------------------------------------
# Plain-JAX glue: exact PyTorch F.interpolate(nearest) / F.adaptive_max_pool2d
# semantics, operating on NHWC tensors.
# ----------------------------------------------------------------------------
def nearest_resize_nhwc(x, oh, ow):
    """F.interpolate(mode='nearest'): src = min(floor(dst * in/out), in-1)."""
    ih, iw = x.shape[1], x.shape[2]
    hi = np.minimum(np.floor(np.arange(oh) * (ih / oh)).astype(np.int64), ih - 1)
    wi = np.minimum(np.floor(np.arange(ow) * (iw / ow)).astype(np.int64), iw - 1)
    return x[:, hi][:, :, wi]


def adaptive_max_pool_nhwc(x, oh, ow):
    """F.adaptive_max_pool2d: window [floor(j*ih/oh), ceil((j+1)*ih/oh))."""
    ih, iw = x.shape[1], x.shape[2]
    if ih % oh == 0 and iw % ow == 0:
        kh, kw = ih // oh, iw // ow
        if kh == 1 and kw == 1:
            return x
        init = jnp.array(-jnp.inf, dtype=x.dtype)
        return jax.lax.reduce_window(
            x, init, jax.lax.max,
            window_dimensions=(1, kh, kw, 1),
            window_strides=(1, kh, kw, 1),
            padding="VALID")
    # Exact adaptive fallback for non-divisible sizes.
    rows = []
    for j in range(oh):
        hs, he = (j * ih) // oh, -(-((j + 1) * ih) // oh)
        cols = []
        for k in range(ow):
            ws, we = (k * iw) // ow, -(-((k + 1) * iw) // ow)
            cols.append(jnp.max(x[:, hs:he, ws:we, :], axis=(1, 2)))
        rows.append(jnp.stack(cols, axis=1))
    return jnp.stack(rows, axis=1)


# ----------------------------------------------------------------------------
# Pallas kernel: sum the L gathered levels (1/L folded into weights) into a
# flat, halo-padded bf16 VMEM scratch; 3x3 conv as 9 contiguous-slice matmuls;
# single trim; balanced output + fused refine-level residual output.
# ----------------------------------------------------------------------------
def _make_refine_kernel(L, H, W, C, WP, refine_idx):
    M = H * WP  # padded flat row count of one output slab

    def kernel(*refs):
        feat_refs = refs[:L]            # each: (1, H, W, C); refine level f32, rest bf16
        w_ref = refs[L]                 # (9, C, C) bf16, tap-major, already * 1/L
        b_ref = refs[L + 1]             # (1, C) f32
        bal_ref = refs[L + 2]           # (1, H, W, C) bf16  -- balanced feature
        res_ref = refs[L + 3]           # (1, H, W, C) f32   -- balanced + feats[refine]
        pad_ref = refs[L + 4]           # ((H+4)*WP, C) bf16 flat padded scratch

        # Zero only the halo groups (top 2, bottom 2).  The interior band
        # (including its zero gap columns) is fully rewritten below, so nothing
        # stale survives across grid steps / megacore shards.  NOT gated on
        # program_id: the scratch persists per-core.
        zeros_halo = jnp.zeros((2 * WP, C), dtype=pad_ref.dtype)
        pad_ref[0:2 * WP, :] = zeros_halo
        pad_ref[(H + 2) * WP:(H + 4) * WP, :] = zeros_halo

        # Sum the L gathered levels in f32 (1/L is folded into the weights),
        # cast once to bf16, right-pad W -> WP with the zero gap columns (they
        # double as the left/right conv halo in the flat layout) and write the
        # whole interior band with ONE sublane-aligned store (offset 2*WP).
        acc = feat_refs[0][0].astype(jnp.float32)
        for l in range(1, L):
            acc = acc + feat_refs[l][0].astype(jnp.float32)
        s = acc.astype(pad_ref.dtype)                                # (H, W, C)
        gap = jnp.zeros((H, WP - W, C), dtype=pad_ref.dtype)
        band = jnp.concatenate([s, gap], axis=1).reshape(M, C)       # (H*WP, C)
        pad_ref[2 * WP:(H + 2) * WP, :] = band

        # 3x3 conv as 9 matmuls on *contiguous* flat slices of the padded
        # scratch (no shifted slice + reshape relayouts).  Tap (dy, dx) reads
        # M rows starting at (dy+1)*WP + dx - 1.
        acc_out = None
        for dy in range(3):
            for dx in range(3):
                off = (dy + 1) * WP + (dx - 1)
                part = jnp.dot(pad_ref[off:off + M, :], w_ref[dy * 3 + dx],
                               preferred_element_type=jnp.float32)
                acc_out = part if acc_out is None else acc_out + part

        # Bias once, then a single trim dropping the WP - W junk columns.
        out = (acc_out + b_ref[...]).reshape(H, WP, C)[:, :W, :]     # f32 (H,W,C)

        bal_ref[0] = out.astype(bal_ref.dtype)
        # Fused refine-level residual: its gathered block *is* the original
        # feature map (identity pool), already resident in VMEM, kept at f32.
        res_ref[0] = (out + feat_refs[refine_idx][0].astype(jnp.float32)
                      ).astype(res_ref.dtype)

    return kernel


def refine_conv_pallas(gathered_list, weight_oihw, bias, refine_level):
    """gathered_list: L arrays of (N, H, W, C).

    Returns (balanced, res_refine):
      balanced   (N, H, W, C) bf16 : conv3x3(mean(gathered)) + bias
      res_refine (N, H, W, C) f32  : gathered[refine_level] + balanced (exact f32 add)
    """
    L = len(gathered_list)
    N, H, W, C = gathered_list[0].shape
    in_dtype = gathered_list[0].dtype
    in_itemsize = jnp.dtype(in_dtype).itemsize

    WP = _round_up(W + 1, 8)          # flat row pitch (>= W+1 so the gap is the halo)
    TOTAL_ROWS = (H + 4) * WP         # 2 top halo groups + H interior + 2 bottom

    # bf16 at the pallas_call boundary for every level except the refine one
    # (kept at full precision because it also feeds the fused residual add).
    feats_in = [g if l == refine_level else g.astype(jnp.bfloat16)
                for l, g in enumerate(gathered_list)]

    # OIHW -> (dy, dx, ci, co) -> (9, C, C), tap-major; fold in the 1/L average.
    w9 = (jnp.transpose(weight_oihw, (2, 3, 1, 0)).reshape(9, C, C)
          * jnp.float32(1.0 / L)).astype(jnp.bfloat16)
    b2 = bias.reshape(1, C).astype(jnp.float32)

    in_specs = [pl.BlockSpec((1, H, W, C), lambda n: (n, 0, 0, 0))
                for _ in range(L)]
    in_specs += [
        pl.BlockSpec((9, C, C), lambda n: (0, 0, 0)),
        pl.BlockSpec((1, C), lambda n: (0, 0)),
    ]
    out_shape = (jax.ShapeDtypeStruct((N, H, W, C), jnp.bfloat16),
                 jax.ShapeDtypeStruct((N, H, W, C), in_dtype))
    out_specs = (pl.BlockSpec((1, H, W, C), lambda n: (n, 0, 0, 0)),
                 pl.BlockSpec((1, H, W, C), lambda n: (n, 0, 0, 0)))

    in_bytes = sum(N * H * W * C * jnp.dtype(f.dtype).itemsize for f in feats_in)
    in_bytes += 9 * C * C * 2 + C * 4
    out_bytes = N * H * W * C * (2 + in_itemsize)
    cost = pl.CostEstimate(
        flops=2 * N * H * WP * 9 * C * C + L * N * H * W * C,
        transcendentals=0,
        bytes_accessed=in_bytes + out_bytes,
    )

    # Per-step VMEM footprint estimate -> scoped limit (32..96 MiB).
    per_step = 2 * (sum(H * W * C * jnp.dtype(f.dtype).itemsize for f in feats_in)
                    + 9 * C * C * 2 + C * 4
                    + H * W * C * (2 + in_itemsize))
    per_step += TOTAL_ROWS * C * 2          # bf16 scratch
    per_step += 2 * H * WP * C * 4          # f32 accumulator + temporaries
    vmem_limit = int(max(32 * 1024 * 1024, min(96 * 1024 * 1024, 4 * per_step)))

    balanced, res_refine = pl.pallas_call(
        _make_refine_kernel(L, H, W, C, WP, refine_level),
        out_shape=out_shape,
        grid_spec=pltpu.PrefetchScalarGridSpec(
            num_scalar_prefetch=0,
            grid=(N,),
            in_specs=in_specs,
            out_specs=out_specs,
            scratch_shapes=[pltpu.VMEM((TOTAL_ROWS, C), jnp.bfloat16)],
        ),
        compiler_params=pltpu.CompilerParams(
            dimension_semantics=("parallel",),
            vmem_limit_bytes=vmem_limit,
        ),
        cost_estimate=cost,
    )(*feats_in, w9, b2)

    return balanced, res_refine


# ----------------------------------------------------------------------------
# BFP forward (PyTorch-equivalent), NCHW in / NCHW out.
# ----------------------------------------------------------------------------
def bfp_forward(inputs_nchw, weight_oihw, bias, number_level, refine_level):
    assert len(inputs_nchw) == number_level
    feats = [jnp.transpose(x, (0, 2, 3, 1)) for x in inputs_nchw]   # -> NHWC
    mid_h, mid_w = feats[refine_level].shape[1], feats[refine_level].shape[2]

    # Gather all levels to the middle resolution.
    gathered = []
    for i in range(number_level):
        if i < refine_level:
            gathered.append(nearest_resize_nhwc(feats[i], mid_h, mid_w))
        else:
            gathered.append(adaptive_max_pool_nhwc(feats[i], mid_h, mid_w))

    # Fused sum/avg + 3x3 conv + bias + refine-level residual.
    balanced, res_refine = refine_conv_pallas(gathered, weight_oihw, bias,
                                              refine_level)

    # Scatter the refined feature back to every level and add the residual.
    res = []
    for i in range(number_level):
        if i == refine_level:
            res.append(res_refine)               # fused in-kernel (exact f32 add)
            continue
        ih, iw = feats[i].shape[1], feats[i].shape[2]
        if i < refine_level:
            out = adaptive_max_pool_nhwc(balanced, ih, iw)
        else:
            out = nearest_resize_nhwc(balanced, ih, iw)
        res.append((feats[i] + out).astype(feats[i].dtype))

    return [jnp.transpose(r, (0, 3, 1, 2)) for r in res]            # -> NCHW


# ----------------------------------------------------------------------------
# Pure-JAX reference for the fused (average + conv) stage, for sanity checking.
# ----------------------------------------------------------------------------
def _reference_balanced(gathered_nhwc, w_hwio, bias, number_level):
    avg = sum(gathered_nhwc) / number_level
    out = jax.lax.conv_general_dilated(
        avg, w_hwio, window_strides=(1, 1), padding="SAME",
        dimension_numbers=("NHWC", "HWIO", "NHWC"),
        precision=jax.lax.Precision.HIGHEST)
    return out + bias[None, None, None, :]


if __name__ == "__main__":
    # Small synthetic configuration consistent with the module.
    N = 2                 # batch
    C = 32                # in_channel
    number_level = 3
    refine_level = 1
    sizes = [4, 8, 16]    # level spatial sizes (middle level = 8x8)

    key = jax.random.PRNGKey(0)
    keys = jax.random.split(key, number_level + 2)

    # Deterministic parameter init for the 'conv' refine: Conv2d(C, C, 3, pad=1)
    fan_in = C * 3 * 3
    weight_oihw = jax.random.normal(keys[0], (C, C, 3, 3), jnp.float32) / math.sqrt(fan_in)
    bias = 0.1 * jax.random.normal(keys[1], (C,), jnp.float32)

    # Pyramid inputs (NCHW, like the PyTorch module).
    inputs = [
        jax.random.normal(keys[2 + i], (N, C, sizes[i], sizes[i]), jnp.float32)
        for i in range(number_level)
    ]

    outputs = bfp_forward(inputs, weight_oihw, bias, number_level, refine_level)
    outputs = [jax.block_until_ready(o) for o in outputs]

    # Sanity-check the Pallas stage against a pure-JAX reference.  The kernel
    # runs the matmuls in bf16 (inputs/weights) with f32 accumulation, so the
    # reference mirrors the boundary cast and tolerance covers bf16 rounding.
    feats_nhwc = [jnp.transpose(x, (0, 2, 3, 1)) for x in inputs]
    mid = sizes[refine_level]
    gathered = []
    for i in range(number_level):
        if i < refine_level:
            gathered.append(nearest_resize_nhwc(feats_nhwc[i], mid, mid))
        else:
            gathered.append(adaptive_max_pool_nhwc(feats_nhwc[i], mid, mid))

    balanced_pallas, res_refine_pallas = refine_conv_pallas(
        gathered, weight_oihw, bias, refine_level)
    balanced_pallas = jax.block_until_ready(balanced_pallas).astype(jnp.float32)
    res_refine_pallas = jax.block_until_ready(res_refine_pallas)

    gathered_cast = [
        g if i == refine_level else g.astype(jnp.bfloat16).astype(jnp.float32)
        for i, g in enumerate(gathered)
    ]
    w_hwio = jnp.transpose(weight_oihw, (2, 3, 1, 0))
    balanced_ref = jax.block_until_ready(
        _reference_balanced(gathered_cast, w_hwio, bias, number_level))
    res_refine_ref = gathered[refine_level] + balanced_ref

    scale_b = float(jnp.max(jnp.abs(balanced_ref))) + 1e-6
    err_b = float(jnp.max(jnp.abs(balanced_pallas - balanced_ref)))
    assert err_b <= 2e-2 * scale_b + 1e-2, f"balanced mismatch: {err_b} vs scale {scale_b}"

    scale_r = float(jnp.max(jnp.abs(res_refine_ref))) + 1e-6
    err_r = float(jnp.max(jnp.abs(res_refine_pallas - res_refine_ref)))
    assert err_r <= 2e-2 * scale_r + 1e-2, f"residual mismatch: {err_r} vs scale {scale_r}"

    # Basic shape / dtype check of the full BFP output list.
    for i, o in enumerate(outputs):
        assert o.shape == (N, C, sizes[i], sizes[i])
        assert o.dtype == jnp.float32

    print("KERNEL_OK")
</pallas_src>

<mosaic_0001>
module attributes {stable_mosaic.version = 11 : i64} {
  func.func @kernel(%arg0: i32, %arg1: memref<1x8x8x32xbf16, #tpu.memory_space<vmem>>, %arg2: memref<1x8x8x32xf32, #tpu.memory_space<vmem>>, %arg3: memref<1x8x8x32xbf16, #tpu.memory_space<vmem>>, %arg4: memref<9x32x32xbf16, #tpu.memory_space<vmem>>, %arg5: memref<1x32xf32, #tpu.memory_space<vmem>>, %arg6: memref<1x8x8x32xbf16, #tpu.memory_space<vmem>>, %arg7: memref<1x8x8x32xf32, #tpu.memory_space<vmem>>, %arg8: memref<192x32xbf16, #tpu.memory_space<vmem>>) attributes {dimension_semantics = [#tpu.dimension_semantics<parallel>], iteration_bounds = array<i64: 2>, scalar_prefetch = 0 : i64, scratch_operands = 1 : i64, tpu.core_type = #tpu.core_type<tc>, window_params = [{transform_indices = @transform_0, window_bounds = array<i64: 1, 8, 8, 32>}, {transform_indices = @transform_1, window_bounds = array<i64: 1, 8, 8, 32>}, {transform_indices = @transform_2, window_bounds = array<i64: 1, 8, 8, 32>}, {pipeline_mode = #tpu.pipeline_mode<synchronous>, transform_indices = @transform_3, window_bounds = array<i64: 9, 32, 32>}, {pipeline_mode = #tpu.pipeline_mode<synchronous>, transform_indices = @transform_4, window_bounds = array<i64: 1, 32>}, {transform_indices = @transform_5, window_bounds = array<i64: 1, 8, 8, 32>}, {transform_indices = @transform_6, window_bounds = array<i64: 1, 8, 8, 32>}]} {
    %cst = arith.constant 0.000000e+00 : bf16
    %0 = vector.broadcast %cst : bf16 to vector<32x32xbf16>
    %c0 = arith.constant 0 : index
    %c0_0 = arith.constant 0 : index
    %1 = vector.load %arg8[%c0, %c0_0] : memref<192x32xbf16, #tpu.memory_space<vmem>>, vector<32x32xbf16>
    tpu.vector_store %arg8[%c0, %c0_0], %0 {strides = array<i32>} : memref<192x32xbf16, #tpu.memory_space<vmem>>, vector<32x32xbf16>,
    %c160 = arith.constant 160 : index
    %c0_1 = arith.constant 0 : index
    %2 = vector.load %arg8[%c160, %c0_1] : memref<192x32xbf16, #tpu.memory_space<vmem>>, vector<32x32xbf16>
    tpu.vector_store %arg8[%c160, %c0_1], %0 {strides = array<i32>} : memref<192x32xbf16, #tpu.memory_space<vmem>>, vector<32x32xbf16>,
    %c0_2 = arith.constant 0 : index
    %c0_3 = arith.constant 0 : index
    %c0_4 = arith.constant 0 : index
    %c0_5 = arith.constant 0 : index
    %3 = vector.load %arg1[%c0_2, %c0_3, %c0_4, %c0_5] : memref<1x8x8x32xbf16, #tpu.memory_space<vmem>>, vector<1x8x8x32xbf16>
    %4 = vector.shape_cast %3 : vector<1x8x8x32xbf16> to vector<8x8x32xbf16>
    %5 = arith.extf %4 : vector<8x8x32xbf16> to vector<8x8x32xf32>
    %c0_6 = arith.constant 0 : index
    %c0_7 = arith.constant 0 : index
    %c0_8 = arith.constant 0 : index
    %c0_9 = arith.constant 0 : index
    %6 = vector.load %arg2[%c0_6, %c0_7, %c0_8, %c0_9] : memref<1x8x8x32xf32, #tpu.memory_space<vmem>>, vector<1x8x8x32xf32>
    %7 = vector.shape_cast %6 : vector<1x8x8x32xf32> to vector<8x8x32xf32>
    %8 = arith.addf %5, %7 : vector<8x8x32xf32>
    %c0_10 = arith.constant 0 : index
    %c0_11 = arith.constant 0 : index
    %c0_12 = arith.constant 0 : index
    %c0_13 = arith.constant 0 : index
    %9 = vector.load %arg3[%c0_10, %c0_11, %c0_12, %c0_13] : memref<1x8x8x32xbf16, #tpu.memory_space<vmem>>, vector<1x8x8x32xbf16>
    %10 = vector.shape_cast %9 : vector<1x8x8x32xbf16> to vector<8x8x32xbf16>
    %11 = arith.extf %10 : vector<8x8x32xbf16> to vector<8x8x32xf32>
    %12 = arith.addf %8, %11 : vector<8x8x32xf32>
    %13 = arith.truncf %12 : vector<8x8x32xf32> to vector<8x8x32xbf16>
    %cst_14 = arith.constant 0.000000e+00 : bf16
    %14 = vector.broadcast %cst_14 : bf16 to vector<8x8x32xbf16>
    %15 = tpu.concatenate %13, %14 in 1 : vector<8x8x32xbf16>, vector<8x8x32xbf16> -> vector<8x16x32xbf16>
    %16 = vector.shape_cast %15 : vector<8x16x32xbf16> to vector<128x32xbf16>
    %c32 = arith.constant 32 : index
    %c0_15 = arith.constant 0 : index
    %17 = vector.load %arg8[%c32, %c0_15] : memref<192x32xbf16, #tpu.memory_space<vmem>>, vector<128x32xbf16>
    tpu.vector_store %arg8[%c32, %c0_15], %16 {strides = array<i32>} : memref<192x32xbf16, #tpu.memory_space<vmem>>, vector<128x32xbf16>,
    %c15 = arith.constant 15 : index
    %c0_16 = arith.constant 0 : index
    %18 = vector.load %arg8[%c15, %c0_16] : memref<192x32xbf16, #tpu.memory_space<vmem>>, vector<128x32xbf16>
    %c0_17 = arith.constant 0 : index
    %c0_18 = arith.constant 0 : index
    %c0_19 = arith.constant 0 : index
    %19 = vector.load %arg4[%c0_17, %c0_18, %c0_19] : memref<9x32x32xbf16, #tpu.memory_space<vmem>>, vector<1x32x32xbf16>
    %20 = vector.shape_cast %19 : vector<1x32x32xbf16> to vector<32x32xbf16>
    %cst_20 = arith.constant dense<0.000000e+00> : vector<128x32xf32>
    %21 = tpu.matmul %18, %20, %cst_20 {dimension_numbers = #tpu.dot_dimension_numbers<[1], [0], [0], [1], [0, 0, 1, 1], [], []>} : vector<128x32xbf16>, vector<32x32xbf16>, vector<128x32xf32> -> vector<128x32xf32>
    %c16 = arith.constant 16 : index
    %c0_21 = arith.constant 0 : index
    %22 = vector.load %arg8[%c16, %c0_21] : memref<192x32xbf16, #tpu.memory_space<vmem>>, vector<128x32xbf16>
    %c1 = arith.constant 1 : index
    %c0_22 = arith.constant 0 : index
    %c0_23 = arith.constant 0 : index
    %23 = vector.load %arg4[%c1, %c0_22, %c0_23] : memref<9x32x32xbf16, #tpu.memory_space<vmem>>, vector<1x32x32xbf16>
    %24 = vector.shape_cast %23 : vector<1x32x32xbf16> to vector<32x32xbf16>
    %cst_24 = arith.constant dense<0.000000e+00> : vector<128x32xf32>
    %25 = tpu.matmul %22, %24, %cst_24 {dimension_numbers = #tpu.dot_dimension_numbers<[1], [0], [0], [1], [0, 0, 1, 1], [], []>} : vector<128x32xbf16>, vector<32x32xbf16>, vector<128x32xf32> -> vector<128x32xf32>
    %26 = arith.addf %21, %25 : vector<128x32xf32>
    %c17 = arith.constant 17 : index
    %c0_25 = arith.constant 0 : index
    %27 = vector.load %arg8[%c17, %c0_25] : memref<192x32xbf16, #tpu.memory_space<vmem>>, vector<128x32xbf16>
    %c2 = arith.constant 2 : index
    %c0_26 = arith.constant 0 : index
    %c0_27 = arith.constant 0 : index
    %28 = vector.load %arg4[%c2, %c0_26, %c0_27] : memref<9x32x32xbf16, #tpu.memory_space<vmem>>, vector<1x32x32xbf16>
    %29 = vector.shape_cast %28 : vector<1x32x32xbf16> to vector<32x32xbf16>
    %cst_28 = arith.constant dense<0.000000e+00> : vector<128x32xf32>
    %30 = tpu.matmul %27, %29, %cst_28 {dimension_numbers = #tpu.dot_dimension_numbers<[1], [0], [0], [1], [0, 0, 1, 1], [], []>} : vector<128x32xbf16>, vector<32x32xbf16>, vector<128x32xf32> -> vector<128x32xf32>
    %31 = arith.addf %26, %30 : vector<128x32xf32>
    %c31 = arith.constant 31 : index
    %c0_29 = arith.constant 0 : index
    %32 = vector.load %arg8[%c31, %c0_29] : memref<192x32xbf16, #tpu.memory_space<vmem>>, vector<128x32xbf16>
    %c3 = arith.constant 3 : index
    %c0_30 = arith.constant 0 : index
    %c0_31 = arith.constant 0 : index
    %33 = vector.load %arg4[%c3, %c0_30, %c0_31] : memref<9x32x32xbf16, #tpu.memory_space<vmem>>, vector<1x32x32xbf16>
    %34 = vector.shape_cast %33 : vector<1x32x32xbf16> to vector<32x32xbf16>
    %cst_32 = arith.constant dense<0.000000e+00> : vector<128x32xf32>
    %35 = tpu.matmul %32, %34, %cst_32 {dimension_numbers = #tpu.dot_dimension_numbers<[1], [0], [0], [1], [0, 0, 1, 1], [], []>} : vector<128x32xbf16>, vector<32x32xbf16>, vector<128x32xf32> -> vector<128x32xf32>
    %36 = arith.addf %31, %35 : vector<128x32xf32>
    %c32_33 = arith.constant 32 : index
    %c0_34 = arith.constant 0 : index
    %37 = vector.load %arg8[%c32_33, %c0_34] : memref<192x32xbf16, #tpu.memory_space<vmem>>, vector<128x32xbf16>
    %c4 = arith.constant 4 : index
    %c0_35 = arith.constant 0 : index
    %c0_36 = arith.constant 0 : index
    %38 = vector.load %arg4[%c4, %c0_35, %c0_36] : memref<9x32x32xbf16, #tpu.memory_space<vmem>>, vector<1x32x32xbf16>
    %39 = vector.shape_cast %38 : vector<1x32x32xbf16> to vector<32x32xbf16>
    %cst_37 = arith.constant dense<0.000000e+00> : vector<128x32xf32>
    %40 = tpu.matmul %37, %39, %cst_37 {dimension_numbers = #tpu.dot_dimension_numbers<[1], [0], [0], [1], [0, 0, 1, 1], [], []>} : vector<128x32xbf16>, vector<32x32xbf16>, vector<128x32xf32> -> vector<128x32xf32>
    %41 = arith.addf %36, %40 : vector<128x32xf32>
    %c33 = arith.constant 33 : index
    %c0_38 = arith.constant 0 : index
    %42 = vector.load %arg8[%c33, %c0_38] : memref<192x32xbf16, #tpu.memory_space<vmem>>, vector<128x32xbf16>
    %c5 = arith.constant 5 : index
    %c0_39 = arith.constant 0 : index
    %c0_40 = arith.constant 0 : index
    %43 = vector.load %arg4[%c5, %c0_39, %c0_40] : memref<9x32x32xbf16, #tpu.memory_space<vmem>>, vector<1x32x32xbf16>
    %44 = vector.shape_cast %43 : vector<1x32x32xbf16> to vector<32x32xbf16>
    %cst_41 = arith.constant dense<0.000000e+00> : vector<128x32xf32>
    %45 = tpu.matmul %42, %44, %cst_41 {dimension_numbers = #tpu.dot_dimension_numbers<[1], [0], [0], [1], [0, 0, 1, 1], [], []>} : vector<128x32xbf16>, vector<32x32xbf16>, vector<128x32xf32> -> vector<128x32xf32>
    %46 = arith.addf %41, %45 : vector<128x32xf32>
    %c47 = arith.constant 47 : index
    %c0_42 = arith.constant 0 : index
    %47 = vector.load %arg8[%c47, %c0_42] : memref<192x32xbf16, #tpu.memory_space<vmem>>, vector<128x32xbf16>
    %c6 = arith.constant 6 : index
    %c0_43 = arith.constant 0 : index
    %c0_44 = arith.constant 0 : index
    %48 = vector.load %arg4[%c6, %c0_43, %c0_44] : memref<9x32x32xbf16, #tpu.memory_space<vmem>>, vector<1x32x32xbf16>
    %49 = vector.shape_cast %48 : vector<1x32x32xbf16> to vector<32x32xbf16>
    %cst_45 = arith.constant dense<0.000000e+00> : vector<128x32xf32>
    %50 = tpu.matmul %47, %49, %cst_45 {dimension_numbers = #tpu.dot_dimension_numbers<[1], [0], [0], [1], [0, 0, 1, 1], [], []>} : vector<128x32xbf16>, vector<32x32xbf16>, vector<128x32xf32> -> vector<128x32xf32>
    %51 = arith.addf %46, %50 : vector<128x32xf32>
    %c48 = arith.constant 48 : index
    %c0_46 = arith.constant 0 : index
    %52 = vector.load %arg8[%c48, %c0_46] : memref<192x32xbf16, #tpu.memory_space<vmem>>, vector<128x32xbf16>
    %c7 = arith.constant 7 : index
    %c0_47 = arith.constant 0 : index
    %c0_48 = arith.constant 0 : index
    %53 = vector.load %arg4[%c7, %c0_47, %c0_48] : memref<9x32x32xbf16, #tpu.memory_space<vmem>>, vector<1x32x32xbf16>
    %54 = vector.shape_cast %53 : vector<1x32x32xbf16> to vector<32x32xbf16>
    %cst_49 = arith.constant dense<0.000000e+00> : vector<128x32xf32>
    %55 = tpu.matmul %52, %54, %cst_49 {dimension_numbers = #tpu.dot_dimension_numbers<[1], [0], [0], [1], [0, 0, 1, 1], [], []>} : vector<128x32xbf16>, vector<32x32xbf16>, vector<128x32xf32> -> vector<128x32xf32>
    %56 = arith.addf %51, %55 : vector<128x32xf32>
    %c49 = arith.constant 49 : index
    %c0_50 = arith.constant 0 : index
    %57 = vector.load %arg8[%c49, %c0_50] : memref<192x32xbf16, #tpu.memory_space<vmem>>, vector<128x32xbf16>
    %c8 = arith.constant 8 : index
    %c0_51 = arith.constant 0 : index
    %c0_52 = arith.constant 0 : index
    %58 = vector.load %arg4[%c8, %c0_51, %c0_52] : memref<9x32x32xbf16, #tpu.memory_space<vmem>>, vector<1x32x32xbf16>
    %59 = vector.shape_cast %58 : vector<1x32x32xbf16> to vector<32x32xbf16>
    %cst_53 = arith.constant dense<0.000000e+00> : vector<128x32xf32>
    %60 = tpu.matmul %57, %59, %cst_53 {dimension_numbers = #tpu.dot_dimension_numbers<[1], [0], [0], [1], [0, 0, 1, 1], [], []>} : vector<128x32xbf16>, vector<32x32xbf16>, vector<128x32xf32> -> vector<128x32xf32>
    %61 = arith.addf %56, %60 : vector<128x32xf32>
    %c0_54 = arith.constant 0 : index
    %c0_55 = arith.constant 0 : index
    %62 = vector.load %arg5[%c0_54, %c0_55] : memref<1x32xf32, #tpu.memory_space<vmem>>, vector<1x32xf32>
    %63 = vector.broadcast %62 : vector<1x32xf32> to vector<128x32xf32>
    %64 = arith.addf %61, %63 : vector<128x32xf32>
    %65 = vector.shape_cast %64 : vector<128x32xf32> to vector<8x16x32xf32>
    %66 = vector.extract_strided_slice %65 {offsets = [0, 0, 0], sizes = [8, 8, 32], strides = [1, 1, 1]} : vector<8x16x32xf32> to vector<8x8x32xf32>
    %67 = arith.truncf %66 : vector<8x8x32xf32> to vector<8x8x32xbf16>
    %c0_56 = arith.constant 0 : index
    %c0_57 = arith.constant 0 : index
    %c0_58 = arith.constant 0 : index
    %c0_59 = arith.constant 0 : index
    %68 = vector.load %arg6[%c0_56, %c0_57, %c0_58, %c0_59] : memref<1x8x8x32xbf16, #tpu.memory_space<vmem>>, vector<1x8x8x32xbf16>
    %69 = vector.shape_cast %68 : vector<1x8x8x32xbf16> to vector<8x8x32xbf16>
    %70 = vector.shape_cast %67 : vector<8x8x32xbf16> to vector<1x8x8x32xbf16>
    tpu.vector_store %arg6[%c0_56, %c0_57, %c0_58, %c0_59], %70 {strides = array<i32>} : memref<1x8x8x32xbf16, #tpu.memory_space<vmem>>, vector<1x8x8x32xbf16>,
    %c0_60 = arith.constant 0 : index
    %c0_61 = arith.constant 0 : index
    %c0_62 = arith.constant 0 : index
    %c0_63 = arith.constant 0 : index
    %71 = vector.load %arg2[%c0_60, %c0_61, %c0_62, %c0_63] : memref<1x8x8x32xf32, #tpu.memory_space<vmem>>, vector<1x8x8x32xf32>
    %72 = vector.shape_cast %71 : vector<1x8x8x32xf32> to vector<8x8x32xf32>
    %73 = arith.addf %66, %72 : vector<8x8x32xf32>
    %c0_64 = arith.constant 0 : index
    %c0_65 = arith.constant 0 : index
    %c0_66 = arith.constant 0 : index
    %c0_67 = arith.constant 0 : index
    %74 = vector.load %arg7[%c0_64, %c0_65, %c0_66, %c0_67] : memref<1x8x8x32xf32, #tpu.memory_space<vmem>>, vector<1x8x8x32xf32>
    %75 = vector.shape_cast %74 : vector<1x8x8x32xf32> to vector<8x8x32xf32>
    %76 = vector.shape_cast %73 : vector<8x8x32xf32> to vector<1x8x8x32xf32>
    tpu.vector_store %arg7[%c0_64, %c0_65, %c0_66, %c0_67], %76 {strides = array<i32>} : memref<1x8x8x32xf32, #tpu.memory_space<vmem>>, vector<1x8x8x32xf32>,
    return
  }
  func.func @transform_0(%arg0: i32) -> (i32, i32, i32, i32) {
    %c0_i32 = arith.constant 0 : i32
    %c0_i32_0 = arith.constant 0 : i32
    %c0_i32_1 = arith.constant 0 : i32
    %c0_i32_2 = arith.constant 0 : i32
    return %arg0, %c0_i32, %c0_i32_0, %c0_i32_1 : i32, i32, i32, i32
  }
  func.func @transform_1(%arg0: i32) -> (i32, i32, i32, i32) {
    %c0_i32 = arith.constant 0 : i32
    %c0_i32_0 = arith.constant 0 : i32
    %c0_i32_1 = arith.constant 0 : i32
    %c0_i32_2 = arith.constant 0 : i32
    return %arg0, %c0_i32, %c0_i32_0, %c0_i32_1 : i32, i32, i32, i32
  }
  func.func @transform_2(%arg0: i32) -> (i32, i32, i32, i32) {
    %c0_i32 = arith.constant 0 : i32
    %c0_i32_0 = arith.constant 0 : i32
    %c0_i32_1 = arith.constant 0 : i32
    %c0_i32_2 = arith.constant 0 : i32
    return %arg0, %c0_i32, %c0_i32_0, %c0_i32_1 : i32, i32, i32, i32
  }
  func.func @transform_3(%arg0: i32) -> (i32, i32, i32) {
    %c0_i32 = arith.constant 0 : i32
    %c0_i32_0 = arith.constant 0 : i32
    %c0_i32_1 = arith.constant 0 : i32
    %c0_i32_2 = arith.constant 0 : i32
    return %c0_i32, %c0_i32_0, %c0_i32_1 : i32, i32, i32
  }
  func.func @transform_4(%arg0: i32) -> (i32, i32) {
    %c0_i32 = arith.constant 0 : i32
    %c0_i32_0 = arith.constant 0 : i32
    %c0_i32_1 = arith.constant 0 : i32
    return %c0_i32, %c0_i32_0 : i32, i32
  }
  func.func @transform_5(%arg0: i32) -> (i32, i32, i32, i32) {
    %c0_i32 = arith.constant 0 : i32
    %c0_i32_0 = arith.constant 0 : i32
    %c0_i32_1 = arith.constant 0 : i32
    %c0_i32_2 = arith.constant 0 : i32
    return %arg0, %c0_i32, %c0_i32_0, %c0_i32_1 : i32, i32, i32, i32
  }
  func.func @transform_6(%arg0: i32) -> (i32, i32, i32, i32) {
    %c0_i32 = arith.constant 0 : i32
    %c0_i32_0 = arith.constant 0 : i32
    %c0_i32_1 = arith.constant 0 : i32
    %c0_i32_2 = arith.constant 0 : i32
    return %arg0, %c0_i32, %c0_i32_0, %c0_i32_1 : i32, i32, i32, i32
  }
}

</mosaic_0001>

<llo_original>
// kernel: tpu_custom_call.1
$region0: #{tpu_custom_call.1}
  #allocation0 [shape = 'u32[]', space=smem, size = 0x4, offset = 0x4, fixed_abs, tag = 'smem constant byte address 0x4 - core index']
  #allocation1 [shape = 'u32[144,128]{1,0:T(1,128)}', space=vmem, size = 0x12000, scoped, tag = 'internal scratch']
  #allocation2 [shape = 'bf16[192,32]{1,0:T(16,128)(2,1)}', space=vmem, size = 0xc000, scoped, tag = 'scratch operand']
  %s0 = inlined_call_operand.hbm [shape: bf16[2,8,8,32], index: 0, kind: input, shape index: {}]
  %s1 = inlined_call_operand.hbm [shape: f32[2,8,8,32], index: 1, kind: input, shape index: {}]
  %s2 = inlined_call_operand.hbm [shape: bf16[2,8,8,32], index: 2, kind: input, shape index: {}]
  %s3 = inlined_call_operand.hbm [shape: bf16[9,32,32], index: 3, kind: input, shape index: {}]
  %s4 = inlined_call_operand.vmem [shape: f32[1,32], index: 4, kind: input, shape index: {}]
  %s5 = inlined_call_operand.hbm [shape: bf16[2,8,8,32], index: 5, kind: output, shape index: {0}]
  %s6 = inlined_call_operand.hbm [shape: f32[2,8,8,32], index: 6, kind: output, shape index: {1}]
  %7 = xla_tuple %s5, %s6
  %s8 = sld [smem:[#allocation0]]
  $region77: #{tpu_custom_call.1} parent=0
    _
  %s10 = ssub.s32 1, %s8
  %s11 = scalar_select 0, %s10, %s8
  $region1: #{tpu_custom_call.1} parent=0
    #allocation3 [shape = 'u8[32768]{0}', space=vmem, size = 0x8000, scoped, tag = 'input window, operand 0']
    #allocation4 [shape = 's32[2]{0}', space=sflag, size = 0x8, scoped, tag = 'scoped memory for tpu_custom_call.1']
    #allocation5 [shape = 's32[2]{0}', space=sflag, size = 0x8, scoped, tag = 'scoped memory for tpu_custom_call.1']
    #allocation6 [shape = 'u8[65536]{0}', space=vmem, size = 0x10000, scoped, tag = 'input window, operand 1']
    #allocation7 [shape = 's32[2]{0}', space=sflag, size = 0x8, scoped, tag = 'scoped memory for tpu_custom_call.1']
    #allocation8 [shape = 'u8[32768]{0}', space=vmem, size = 0x8000, scoped, tag = 'input window, operand 2']
    #allocation9 [shape = 'u8[73728]{0}', space=vmem, size = 0x12000, scoped, tag = 'input window, operand 3, single buffered']
    #allocation10 [shape = 's32[1]{0}', space=sflag, size = 0x4, scoped, tag = 'scoped memory for tpu_custom_call.1']
    #allocation11 [shape = 'u8[32768]{0}', space=vmem, size = 0x8000, scoped, tag = 'output window, operand 0']
    #allocation12 [shape = 'u8[65536]{0}', space=vmem, size = 0x10000, scoped, tag = 'output window, operand 1']
    #allocation13 [shape = 's32[2]{0}', space=sflag, size = 0x8, scoped, tag = 'scoped memory for tpu_custom_call.1']
    %12 = vsyncpa [#allocation4], 0
    %s13 = scalar_lea.sflag [#allocation4], 1
    %14 = vsyncpa %s13, 0
    %15 = vsyncpa [#allocation7], 0
    %s16 = scalar_lea.sflag [#allocation7], 1
    %17 = vsyncpa %s16, 0
    %18 = vsyncpa [#allocation10], 0
    %19 = vsyncpa [#allocation5], 0
    %s20 = scalar_lea.sflag [#allocation5], 1
    %21 = vsyncpa %s20, 0
    %22 = vsyncpa [#allocation13], 0
    %s23 = scalar_lea.sflag [#allocation13], 1
    %24 = vsyncpa %s23, 0
    loop: start=0, step=1, limit=4
    $region2: #{tpu_custom_call.1} parent=1 // loop_pre_header
      _
    $region3: #{tpu_custom_call.1} parent=1 // loop_header
      %s26 = sphi 0, %s30
      %p27 = scmp.ge.s32.totalorder %s26, 4
      %s36 = sphi 0, %s38
      %s39 = sphi 0, %s36
      %s40 = sphi 0, %s39
      %s56 = sphi 0, %s40
      %s62 = sphi 0, %s64
      %s65 = sphi 0, %s62
      %s66 = sphi 0, %s65
      %s82 = sphi 0, %s66
      %s88 = sphi 0, %s90
      %s91 = sphi 0, %s88
      %s92 = sphi 0, %s91
      %s108 = sphi 0, %s92
      %s112 = sphi 0, %s112
      %s114 = sphi 0, %s112
      %s115 = sphi 0, %s114
      %s129 = sphi 0, %s115
      %s133 = sphi 0, %s133
      %s135 = sphi 0, %s133
      %s136 = sphi 0, %s135
      %s150 = sphi 0, %s136
      %s156 = sphi 0, %s158
      %s159 = sphi 0, %s156
      %s160 = sphi 0, %s159
      %s176 = sphi 0, %s160
      %s182 = sphi 0, %s184
      %s185 = sphi 0, %s182
      %s186 = sphi 0, %s185
      %s202 = sphi 0, %s186
    $region4: #{tpu_custom_call.1} parent=1 // loop_header_branch
      %29 = sbr.rel (%p27) target = $region8
    $region5: #{tpu_custom_call.1} parent=1 // loop_body
      %s31 = ssub.s32 %s26, 1
      %s32 = ssub.s32 %s26, 2
      %s33 = sadd.s32 %s26, 1
      %s34 = ssub.s32 %s26, %s33
      %p35 = scmp.eq.s32.totalorder %s34, 0
      %s37 = sadd.s32 %s36, 1
      %s38 = scalar_select %p35, %s36, %s37
      %p41 = pneg %p35
      %p42 = scmp.eq.s32.totalorder %s26, 1
      %p43 = por %p41, %p42
      %p44 = scmp.ne.s32.totalorder %s36, %s39
      %p45 = scmp.eq.s32.totalorder %s26, 0
      %p46 = por %p44, %p45
      %p47 = scmp.ne.s32.totalorder %s36, %s39
      %p48 = scmp.eq.s32.totalorder %s31, 1
      %p49 = por %p47, %p48
      %p50 = scmp.ne.s32.totalorder %s39, %s40
      %p51 = scmp.eq.s32.totalorder %s31, 0
      %p52 = por %p50, %p51
      %p53 = scmp.ne.s32.totalorder %s39, %s40
      %p54 = scmp.eq.s32.totalorder %s32, 1
      %p55 = por %p53, %p54
      %p57 = scmp.ne.s32.totalorder %s40, %s56
      %p58 = scmp.eq.s32.totalorder %s32, 0
      %p59 = por %p57, %p58
      %s60 = ssub.s32 %s26, %s33
      %p61 = scmp.eq.s32.totalorder %s60, 0
      %s63 = sadd.s32 %s62, 1
      %s64 = scalar_select %p61, %s62, %s63
      %p67 = pneg %p61
      %p68 = scmp.eq.s32.totalorder %s26, 1
      %p69 = por %p67, %p68
      %p70 = scmp.ne.s32.totalorder %s62, %s65
      %p71 = scmp.eq.s32.totalorder %s26, 0
      %p72 = por %p70, %p71
      %p73 = scmp.ne.s32.totalorder %s62, %s65
      %p74 = scmp.eq.s32.totalorder %s31, 1
      %p75 = por %p73, %p74
      %p76 = scmp.ne.s32.totalorder %s65, %s66
      %p77 = scmp.eq.s32.totalorder %s31, 0
      %p78 = por %p76, %p77
      %p79 = scmp.ne.s32.totalorder %s65, %s66
      %p80 = scmp.eq.s32.totalorder %s32, 1
      %p81 = por %p79, %p80
      %p83 = scmp.ne.s32.totalorder %s66, %s82
      %p84 = scmp.eq.s32.totalorder %s32, 0
      %p85 = por %p83, %p84
      %s86 = ssub.s32 %s26, %s33
      %p87 = scmp.eq.s32.totalorder %s86, 0
      %s89 = sadd.s32 %s88, 1
      %s90 = scalar_select %p87, %s88, %s89
      %p93 = pneg %p87
      %p94 = scmp.eq.s32.totalorder %s26, 1
      %p95 = por %p93, %p94
      %p96 = scmp.ne.s32.totalorder %s88, %s91
      %p97 = scmp.eq.s32.totalorder %s26, 0
      %p98 = por %p96, %p97
      %p99 = scmp.ne.s32.totalorder %s88, %s91
      %p100 = scmp.eq.s32.totalorder %s31, 1
      %p101 = por %p99, %p100
      %p102 = scmp.ne.s32.totalorder %s91, %s92
      %p103 = scmp.eq.s32.totalorder %s31, 0
      %p104 = por %p102, %p103
      %p105 = scmp.ne.s32.totalorder %s91, %s92
      %p106 = scmp.eq.s32.totalorder %s32, 1
      %p107 = por %p105, %p106
      %p109 = scmp.ne.s32.totalorder %s92, %s108
      %p110 = scmp.eq.s32.totalorder %s32, 0
      %p111 = por %p109, %p110
      %s113 = sadd.s32 %s112, 1
      %p116 = scmp.eq.s32.totalorder %s26, 1
      %p117 = scmp.ne.s32.totalorder %s112, %s114
      %p118 = scmp.eq.s32.totalorder %s26, 0
      %p119 = por %p117, %p118
      %p120 = scmp.ne.s32.totalorder %s112, %s114
      %p121 = scmp.eq.s32.totalorder %s31, 1
      %p122 = por %p120, %p121
      %p123 = scmp.ne.s32.totalorder %s114, %s115
      %p124 = scmp.eq.s32.totalorder %s31, 0
      %p125 = por %p123, %p124
      %p126 = scmp.ne.s32.totalorder %s114, %s115
      %p127 = scmp.eq.s32.totalorder %s32, 1
      %p128 = por %p126, %p127
      %p130 = scmp.ne.s32.totalorder %s115, %s129
      %p131 = scmp.eq.s32.totalorder %s32, 0
      %p132 = por %p130, %p131
      %s134 = sadd.s32 %s133, 1
      %p137 = scmp.eq.s32.totalorder %s26, 1
      %p138 = scmp.ne.s32.totalorder %s133, %s135
      %p139 = scmp.eq.s32.totalorder %s26, 0
      %p140 = por %p138, %p139
      %p141 = scmp.ne.s32.totalorder %s133, %s135
      %p142 = scmp.eq.s32.totalorder %s31, 1
      %p143 = por %p141, %p142
      %p144 = scmp.ne.s32.totalorder %s135, %s136
      %p145 = scmp.eq.s32.totalorder %s31, 0
      %p146 = por %p144, %p145
      %p147 = scmp.ne.s32.totalorder %s135, %s136
      %p148 = scmp.eq.s32.totalorder %s32, 1
      %p149 = por %p147, %p148
      %p151 = scmp.ne.s32.totalorder %s136, %s150
      %p152 = scmp.eq.s32.totalorder %s32, 0
      %p153 = por %p151, %p152
      %s154 = ssub.s32 %s26, %s33
      %p155 = scmp.eq.s32.totalorder %s154, 0
      %s157 = sadd.s32 %s156, 1
      %s158 = scalar_select %p155, %s156, %s157
      %p161 = pneg %p155
      %p162 = scmp.eq.s32.totalorder %s26, 1
      %p163 = por %p161, %p162
      %p164 = scmp.ne.s32.totalorder %s156, %s159
      %p165 = scmp.eq.s32.totalorder %s26, 0
      %p166 = por %p164, %p165
      %p167 = scmp.ne.s32.totalorder %s156, %s159
      %p168 = scmp.eq.s32.totalorder %s31, 1
      %p169 = por %p167, %p168
      %p170 = scmp.ne.s32.totalorder %s159, %s160
      %p171 = scmp.eq.s32.totalorder %s31, 0
      %p172 = por %p170, %p171
      %p173 = scmp.ne.s32.totalorder %s159, %s160
      %p174 = scmp.eq.s32.totalorder %s32, 1
      %p175 = por %p173, %p174
      %p177 = scmp.ne.s32.totalorder %s160, %s176
      %p178 = scmp.eq.s32.totalorder %s32, 0
      %p179 = por %p177, %p178
      %s180 = ssub.s32 %s26, %s33
      %p181 = scmp.eq.s32.totalorder %s180, 0
      %s183 = sadd.s32 %s182, 1
      %s184 = scalar_select %p181, %s182, %s183
      %p187 = pneg %p181
      %p188 = scmp.eq.s32.totalorder %s26, 1
      %p189 = por %p187, %p188
      %p190 = scmp.ne.s32.totalorder %s182, %s185
      %p191 = scmp.eq.s32.totalorder %s26, 0
      %p192 = por %p190, %p191
      %p193 = scmp.ne.s32.totalorder %s182, %s185
      %p194 = scmp.eq.s32.totalorder %s31, 1
      %p195 = por %p193, %p194
      %p196 = scmp.ne.s32.totalorder %s185, %s186
      %p197 = scmp.eq.s32.totalorder %s31, 0
      %p198 = por %p196, %p197
      %p199 = scmp.ne.s32.totalorder %s185, %s186
      %p200 = scmp.eq.s32.totalorder %s32, 1
      %p201 = por %p199, %p200
      %p203 = scmp.ne.s32.totalorder %s186, %s202
      %p204 = scmp.eq.s32.totalorder %s32, 0
      %p205 = por %p203, %p204
      %p206 = scmp.le.s32.totalorder 1, %s26
      %p207 = scmp.lt.s32.totalorder %s26, 3
      %p208 = pnand %p206, %p207
      %p209 = pneg %p208
      // Predicated region
      $region9: #{tpu_custom_call.1} parent=5 // pred_check
        _
      $region10: #{tpu_custom_call.1} parent=5 // pred_check_branch
        %211 = sbr.rel (%p208) target = $region12
      $region11: #{tpu_custom_call.1} parent=5 // pred_region
        %s212 = ssub.s32 %s26, 1
        // Predicated region
        $region13: #{tpu_custom_call.1} parent=11 // pred_check
          %p213 = pneg %p125
        $region14: #{tpu_custom_call.1} parent=11 // pred_check_branch
          %215 = sbr.rel (%p213) target = $region16
        $region15: #{tpu_custom_call.1} parent=11 // pred_region
          %s217 = ssub.s32 2304, 2304
          %218 = vsyncadd [#allocation10], %s217
          %s219 = sshll.u32 [#allocation9], 4
          %s220 = int_to_ptr.vmem [resolvable:$true] %s219
          %225 = dma.hbm_to_vmem [thread:$0]  %s3, 2304, %s220, [#allocation10], 64, 64, 4
        $region16: #{tpu_custom_call.1} parent=11 // pred_fallthru
          _
        // Predicated region
        $region17: #{tpu_custom_call.1} parent=11 // pred_check
          %p226 = pneg %p146
        $region18: #{tpu_custom_call.1} parent=11 // pred_check_branch
          %228 = sbr.rel (%p226) target = $region20
        $region19: #{tpu_custom_call.1} parent=11 // pred_region
          _
        $region20: #{tpu_custom_call.1} parent=11 // pred_fallthru
          _
      $region12: #{tpu_custom_call.1} parent=5 // pred_fallthru
        _
      %p229 = scmp.lt.s32.totalorder %s26, 2
      // Predicated region
      $region21: #{tpu_custom_call.1} parent=5 // pred_check
        %p230 = pneg %p229
      $region22: #{tpu_custom_call.1} parent=5 // pred_check_branch
        %232 = sbr.rel (%p230) target = $region24
      $region23: #{tpu_custom_call.1} parent=5 // pred_region
        // Predicated region
        $region25: #{tpu_custom_call.1} parent=23 // pred_check
          %p233 = pneg %p46
        $region26: #{tpu_custom_call.1} parent=23 // pred_check_branch
          %235 = sbr.rel (%p233) target = $region28
        $region27: #{tpu_custom_call.1} parent=23 // pred_region
          %s236 = sand.u32 %s36, 1
          %s237 = scalar_lea.sflag [#allocation4], %s236
          %s238 = sand.u32 %s36, 1
          %s239 = smul.addr %s238, 32
          %s240 = scalar_lea.vmem [#allocation3], %s239
          %s242 = ssub.s32 512, 512
          %243 = vsyncadd %s237, %s242
          %s244 = smul.addr %s26, 8
          %s245 = smul.addr %s244, 64
          %s246 = scalar_lea.hbm %s0, %s245
          %s247 = sshll.u32 %s240, 4
          %s248 = int_to_ptr.vmem [resolvable:$true] %s247
          %253 = dma.hbm_to_vmem [thread:$0]  %s246, 512, %s248, %s237, 64, 64, 4
        $region28: #{tpu_custom_call.1} parent=23 // pred_fallthru
          _
        // Predicated region
        $region29: #{tpu_custom_call.1} parent=23 // pred_check
          %p254 = pneg %p72
        $region30: #{tpu_custom_call.1} parent=23 // pred_check_branch
          %256 = sbr.rel (%p254) target = $region32
        $region31: #{tpu_custom_call.1} parent=23 // pred_region
          %s257 = sand.u32 %s26, 1
          %s258 = scalar_lea.sflag [#allocation7], %s257
          %s259 = sand.u32 %s62, 1
          %s260 = smul.addr %s259, 64
          %s261 = scalar_lea.vmem [#allocation6], %s260
          %s263 = ssub.s32 1024, 1024
          %264 = vsyncadd %s258, %s263
          %s265 = smul.addr %s26, 8
          %s266 = smul.addr %s265, 128
          %s267 = scalar_lea.hbm %s1, %s266
          %s268 = sshll.u32 %s261, 4
          %s269 = int_to_ptr.vmem [resolvable:$true] %s268
          %274 = dma.hbm_to_vmem [thread:$0]  %s267, 1024, %s269, %s258, 128, 128, 8
        $region32: #{tpu_custom_call.1} parent=23 // pred_fallthru
          _
        // Predicated region
        $region33: #{tpu_custom_call.1} parent=23 // pred_check
          %p275 = pneg %p98
        $region34: #{tpu_custom_call.1} parent=23 // pred_check_branch
          %277 = sbr.rel (%p275) target = $region36
        $region35: #{tpu_custom_call.1} parent=23 // pred_region
          %s278 = sand.u32 %s26, 1
          %s279 = scalar_lea.sflag [#allocation7], %s278
          %s280 = sand.u32 %s88, 1
          %s281 = smul.addr %s280, 32
          %s282 = scalar_lea.vmem [#allocation8], %s281
          %s284 = ssub.s32 512, 512
          %285 = vsyncadd %s279, %s284
          %s286 = smul.addr %s26, 8
          %s287 = smul.addr %s286, 64
          %s288 = scalar_lea.hbm %s2, %s287
          %s289 = sshll.u32 %s282, 4
          %s290 = int_to_ptr.vmem [resolvable:$true] %s289
          %295 = dma.hbm_to_vmem [thread:$0]  %s288, 512, %s290, %s279, 64, 64, 4
        $region36: #{tpu_custom_call.1} parent=23 // pred_fallthru
          _
      $region24: #{tpu_custom_call.1} parent=5 // pred_fallthru
        _
      %p296 = scmp.le.s32.totalorder 1, %s26
      %p297 = scmp.lt.s32.totalorder %s26, 3
      %p298 = pnand %p296, %p297
      %p299 = pneg %p298
      // Predicated region
      $region37: #{tpu_custom_call.1} parent=5 // pred_check
        _
      $region38: #{tpu_custom_call.1} parent=5 // pred_check_branch
        %301 = sbr.rel (%p298) target = $region40
      $region39: #{tpu_custom_call.1} parent=5 // pred_region
        %s302 = ssub.s32 %s26, 1
        %s303 = sand.u32 %s39, 1
        %s304 = scalar_lea.sflag [#allocation4], %s303
        %s305 = sand.u32 %s39, 1
        %s306 = smul.addr %s305, 32
        %s307 = scalar_lea.vmem [#allocation3], %s306
        // Predicated region
        $region41: #{tpu_custom_call.1} parent=39 // pred_check
          %p308 = pneg %p52
        $region42: #{tpu_custom_call.1} parent=39 // pred_check_branch
          %310 = sbr.rel (%p308) target = $region44
        $region43: #{tpu_custom_call.1} parent=39 // pred_region
          %311 = dma.done %s304, 512
        $region44: #{tpu_custom_call.1} parent=39 // pred_fallthru
          _
        %s312 = sand.u32 %s31, 1
        %s313 = scalar_lea.sflag [#allocation7], %s312
        %s314 = sand.u32 %s65, 1
        %s315 = smul.addr %s314, 64
        %s316 = scalar_lea.vmem [#allocation6], %s315
        // Predicated region
        $region45: #{tpu_custom_call.1} parent=39 // pred_check
          %p317 = pneg %p78
        $region46: #{tpu_custom_call.1} parent=39 // pred_check_branch
          %319 = sbr.rel (%p317) target = $region48
        $region47: #{tpu_custom_call.1} parent=39 // pred_region
          %320 = dma.done %s313, 1024
        $region48: #{tpu_custom_call.1} parent=39 // pred_fallthru
          _
        %s321 = sand.u32 %s31, 1
        %s322 = scalar_lea.sflag [#allocation7], %s321
        %s323 = sand.u32 %s91, 1
        %s324 = smul.addr %s323, 32
        %s325 = scalar_lea.vmem [#allocation8], %s324
        // Predicated region
        $region49: #{tpu_custom_call.1} parent=39 // pred_check
          %p326 = pneg %p104
        $region50: #{tpu_custom_call.1} parent=39 // pred_check_branch
          %328 = sbr.rel (%p326) target = $region52
        $region51: #{tpu_custom_call.1} parent=39 // pred_region
          %329 = dma.done %s322, 512
        $region52: #{tpu_custom_call.1} parent=39 // pred_fallthru
          _
        // Predicated region
        $region53: #{tpu_custom_call.1} parent=39 // pred_check
          %p330 = pneg %p125
        $region54: #{tpu_custom_call.1} parent=39 // pred_check_branch
          %332 = sbr.rel (%p330) target = $region56
        $region55: #{tpu_custom_call.1} parent=39 // pred_region
          %333 = dma.done [#allocation10], 2304
        $region56: #{tpu_custom_call.1} parent=39 // pred_fallthru
          _
        %s334 = sand.u32 %s39, 1
        %s335 = scalar_lea.sflag [#allocation4], %s334
        %s336 = sand.u32 %s39, 1
        %s337 = smul.addr %s336, 32
        %s338 = scalar_lea.vmem [#allocation3], %s337
        %p339 = pneg %p52
        %p340 = pneg %p49
        %s341 = sand.u32 %s31, 1
        %s342 = scalar_lea.sflag [#allocation7], %s341
        %s343 = sand.u32 %s65, 1
        %s344 = smul.addr %s343, 64
        %s345 = scalar_lea.vmem [#allocation6], %s344
        %p346 = pneg %p78
        %p347 = pneg %p75
        %s348 = sand.u32 %s31, 1
        %s349 = scalar_lea.sflag [#allocation7], %s348
        %s350 = sand.u32 %s91, 1
        %s351 = smul.addr %s350, 32
        %s352 = scalar_lea.vmem [#allocation8], %s351
        %p353 = pneg %p104
        %p354 = pneg %p101
        %p355 = pneg %p125
        %p356 = pneg %p122
        %p357 = pneg %p146
        %p358 = pneg %p143
        %p359 = pneg %p172
        %p360 = pneg %p169
        %s361 = sand.u32 %s159, 1
        %s362 = scalar_lea.sflag [#allocation5], %s361
        %s363 = sand.u32 %s159, 1
        %s364 = smul.addr %s363, 32
        %s365 = scalar_lea.vmem [#allocation11], %s364
        %p366 = pneg %p198
        %p367 = pneg %p195
        %s368 = sand.u32 %s185, 1
        %s369 = scalar_lea.sflag [#allocation13], %s368
        %s370 = sand.u32 %s185, 1
        %s371 = smul.addr %s370, 64
        %s372 = scalar_lea.vmem [#allocation12], %s371
        %vm374 = vcmask 261120
        %375 = vst.msk [vmem:[#allocation2] sm:$0xff] %vm374, 0
        %376 = vst.msk [vmem:[#allocation2 + $0x8] sm:$0xff] %vm374, 0
        %377 = vst.msk [vmem:[#allocation2 + $0x50] sm:$0xff] %vm374, 0
        %378 = vst.msk [vmem:[#allocation2 + $0x58] sm:$0xff] %vm374, 0
        %v379 = vld [vmem:[%s307] sm:$0xf]
        %v380 = vld [vmem:[%s307 + $0x4] sm:$0xf]
        %v381 = vld [vmem:[%s307 + $0x8] sm:$0xf]
        %v382 = vld [vmem:[%s307 + $0xc] sm:$0xf]
        %v383 = vld [vmem:[%s307 + $0x10] sm:$0xf]
        %v384 = vld [vmem:[%s307 + $0x14] sm:$0xf]
        %v385 = vld [vmem:[%s307 + $0x18] sm:$0xf]
        %v386 = vld [vmem:[%s307 + $0x1c] sm:$0xf]
        %v387 = vunpack.c.l.bf16 %v379
        %v388 = vunpack.c.l.bf16 %v380
        %v389 = vunpack.c.l.bf16 %v381
        %v390 = vunpack.c.l.bf16 %v382
        %v391 = vunpack.c.l.bf16 %v383
        %v392 = vunpack.c.l.bf16 %v384
        %v393 = vunpack.c.l.bf16 %v385
        %v394 = vunpack.c.l.bf16 %v386
        %v395 = vld [vmem:[%s316] sm:$0xff]
        %v396 = vld [vmem:[%s316 + $0x8] sm:$0xff]
        %v397 = vld [vmem:[%s316 + $0x10] sm:$0xff]
        %v398 = vld [vmem:[%s316 + $0x18] sm:$0xff]
        %v399 = vld [vmem:[%s316 + $0x20] sm:$0xff]
        %v400 = vld [vmem:[%s316 + $0x28] sm:$0xff]
        %v401 = vld [vmem:[%s316 + $0x30] sm:$0xff]
        %v402 = vld [vmem:[%s316 + $0x38] sm:$0xff]
        %v403 = vadd.f32 %v387, %v395
        %v404 = vadd.f32 %v388, %v396
        %v405 = vadd.f32 %v389, %v397
        %v406 = vadd.f32 %v390, %v398
        %v407 = vadd.f32 %v391, %v399
        %v408 = vadd.f32 %v392, %v400
        %v409 = vadd.f32 %v393, %v401
        %v410 = vadd.f32 %v394, %v402
        %v411 = vld [vmem:[%s325] sm:$0xf]
        %v412 = vld [vmem:[%s325 + $0x4] sm:$0xf]
        %v413 = vld [vmem:[%s325 + $0x8] sm:$0xf]
        %v414 = vld [vmem:[%s325 + $0xc] sm:$0xf]
        %v415 = vld [vmem:[%s325 + $0x10] sm:$0xf]
        %v416 = vld [vmem:[%s325 + $0x14] sm:$0xf]
        %v417 = vld [vmem:[%s325 + $0x18] sm:$0xf]
        %v418 = vld [vmem:[%s325 + $0x1c] sm:$0xf]
        %v419 = vunpack.c.l.bf16 %v411
        %v420 = vunpack.c.l.bf16 %v412
        %v421 = vunpack.c.l.bf16 %v413
        %v422 = vunpack.c.l.bf16 %v414
        %v423 = vunpack.c.l.bf16 %v415
        %v424 = vunpack.c.l.bf16 %v416
        %v425 = vunpack.c.l.bf16 %v417
        %v426 = vunpack.c.l.bf16 %v418
        %v427 = vadd.f32 %v403, %v419
        %v428 = vadd.f32 %v404, %v420
        %v429 = vadd.f32 %v405, %v421
        %v430 = vadd.f32 %v406, %v422
        %v431 = vadd.f32 %v407, %v423
        %v432 = vadd.f32 %v408, %v424
        %v433 = vadd.f32 %v409, %v425
        %v434 = vadd.f32 %v410, %v426
        %v435 = vpack.c.bf16 %v427, %v427
        %v436 = vpack.c.bf16 %v428, %v428
        %v437 = vpack.c.bf16 %v429, %v429
        %v438 = vpack.c.bf16 %v430, %v430
        %v439 = vpack.c.bf16 %v431, %v431
        %v440 = vpack.c.bf16 %v432, %v432
        %v441 = vpack.c.bf16 %v433, %v433
        %v442 = vpack.c.bf16 %v434, %v434
        %vm443 = vcmask 1043456
        %v446 = vsel %vm443, %v435, 0
        %v449 = vsel %vm443, %v436, 0
        %v452 = vsel %vm443, %v437, 0
        %v455 = vsel %vm443, %v438, 0
        %v458 = vsel %vm443, %v439, 0
        %v461 = vsel %vm443, %v440, 0
        %v464 = vsel %vm443, %v441, 0
        %v467 = vsel %vm443, %v442, 0
        %469 = vst.msk [vmem:[#allocation2 + $0x10] sm:$0xff] %vm374, %v446
        %470 = vst.msk [vmem:[#allocation2 + $0x18] sm:$0xff] %vm374, %v449
        %471 = vst.msk [vmem:[#allocation2 + $0x20] sm:$0xff] %vm374, %v452
        %472 = vst.msk [vmem:[#allocation2 + $0x28] sm:$0xff] %vm374, %v455
        %473 = vst.msk [vmem:[#allocation2 + $0x30] sm:$0xff] %vm374, %v458
        %474 = vst.msk [vmem:[#allocation2 + $0x38] sm:$0xff] %vm374, %v461
        %475 = vst.msk [vmem:[#allocation2 + $0x40] sm:$0xff] %vm374, %v464
        %476 = vst.msk [vmem:[#allocation2 + $0x48] sm:$0xff] %vm374, %v467
        %v477 = vld [vmem:[#allocation2] sm:$0x80]
        %v478 = vld [vmem:[#allocation2 + $0x8] sm:$0xff]
        %v479 = vld [vmem:[#allocation2 + $0x10] sm:$0xff]
        %v480 = vld [vmem:[#allocation2 + $0x18] sm:$0xff]
        %v481 = vld [vmem:[#allocation2 + $0x20] sm:$0xff]
        %v482 = vld [vmem:[#allocation2 + $0x28] sm:$0xff]
        %v483 = vld [vmem:[#allocation2 + $0x30] sm:$0xff]
        %v484 = vld [vmem:[#allocation2 + $0x38] sm:$0xff]
        %v485 = vld [vmem:[#allocation2 + $0x40] sm:$0xff]
        %v486 = vld [vmem:[#allocation9] sm:$0xf]
        %v487 = vld [vmem:[#allocation9 + $0x4] sm:$0xf]
        %v488 = vld [vmem:[#allocation9 + $0x8] sm:$0xf]
        %v489 = vld [vmem:[#allocation9 + $0xc] sm:$0xf]
        %s490 = scalar_lea.vmem [#allocation9], 16
        %v491 = vld [vmem:[%s490] sm:$0xf]
        %v492 = vld [vmem:[%s490 + $0x4] sm:$0xf]
        %v493 = vld [vmem:[%s490 + $0x8] sm:$0xf]
        %v494 = vld [vmem:[%s490 + $0xc] sm:$0xf]
        %v499 = vunpack.c.l.b16 %v491
        %v500 = vunpack.c.l.b16 %v492
        %v501 = vunpack.c.l.b16 %v493
        %v502 = vunpack.c.l.b16 %v494
        %v503 = vpack.c.b16 %v500, %v499
        %v504 = vpack.c.b16 %v502, %v501
        %v508 = vsel %vm374, %v478, 0
        %v511 = vsel %vm374, %v479, 0
        %v514 = vsel %vm374, %v480, 0
        %v517 = vsel %vm374, %v481, 0
        %v520 = vsel %vm374, %v482, 0
        %v523 = vsel %vm374, %v483, 0
        %v526 = vsel %vm374, %v484, 0
        %v529 = vsel %vm374, %v485, 0
        %531 = vmatprep.subr.bf16.mxu0 0
        %532 = vmatpush1.bf16.msra.mxu0 %v503
        %533 = vmatprep.subr.bf16.mxu0 0
        %534 = vmatpush1.bf16.msra.mxu0 %v504
        %535 = vmatprep.subr.bf16.mxu0 0
        %536 = vmatpush1.bf16.msra.mxu0 0
        %537 = vmatprep.subr.bf16.mxu0 0
        %538 = vmatpush1.bf16.msra.mxu0 0
        %539 = vmatprep.subr.bf16.mxu0 0
        %540 = vmatpush1.bf16.msra.mxu0 0
        %541 = vmatprep.subr.bf16.mxu0 0
        %542 = vmatpush1.bf16.msra.mxu0 0
        %543 = vmatprep.subr.bf16.mxu0 0
        %544 = vmatpush1.bf16.msra.mxu0 0
        %545 = vmatprep.subr.bf16.mxu0 0
        %546 = vmatpush1.bf16.msra.mxu0 0
        %547 = vmatprep.subr.bf16.mxu0 0
        %548 = vmatpush1.bf16.msra.mxu0 0
        %549 = vmatprep.subr.bf16.mxu0 0
        %550 = vmatpush1.bf16.msra.mxu0 0
        %551 = vmatprep.subr.bf16.mxu0 0
        %552 = vmatpush1.bf16.msra.mxu0 0
        %553 = vmatprep.subr.bf16.mxu0 0
        %554 = vmatpush1.bf16.msra.mxu0 0
        %555 = vmatprep.subr.bf16.mxu0 0
        %556 = vmatpush1.bf16.msra.mxu0 0
        %557 = vmatprep.subr.bf16.mxu0 0
        %558 = vmatpush1.bf16.msra.mxu0 0
        %559 = vmatprep.subr.bf16.mxu0 0
        %560 = vmatpush1.bf16.msra.mxu0 0
        %561 = vmatprep.subr.bf16.mxu0 0
        %562 = vmatpush1.bf16.msra.mxu0 0
        %563 = vmatprep.mubr.bf16.mxu0 0
        %564 = vmatmul.mubr.bf16.gmra.mrb[0].mxu0 %v508
        %v565 = vpop.f32.mrb[0].mxu0
        %v566 = vadd.f32 0.0, %v565
        %v567 = vpop.f32.mrb[0].mxu0
        %v568 = vpop.f32.mrb[0].mxu0
        %v569 = vpop.f32.mrb[0].mxu0
        %570 = vmatprep.mubr.bf16.mxu0 0
        %571 = vmatmul.mubr.bf16.gmra.mrb[0].mxu0 %v511
        %v572 = vpop.f32.mrb[0].mxu0
        %v573 = vadd.f32 0.0, %v572
        %v574 = vpop.f32.mrb[0].mxu0
        %v575 = vpop.f32.mrb[0].mxu0
        %v576 = vpop.f32.mrb[0].mxu0
        %577 = vmatprep.mubr.bf16.mxu0 0
        %578 = vmatmul.mubr.bf16.gmra.mrb[0].mxu0 %v514
        %v579 = vpop.f32.mrb[0].mxu0
        %v580 = vadd.f32 0.0, %v579
        %v581 = vpop.f32.mrb[0].mxu0
        %v582 = vpop.f32.mrb[0].mxu0
        %v583 = vpop.f32.mrb[0].mxu0
        %584 = vmatprep.mubr.bf16.mxu0 0
        %585 = vmatmul.mubr.bf16.gmra.mrb[0].mxu0 %v517
        %v586 = vpop.f32.mrb[0].mxu0
        %v587 = vadd.f32 0.0, %v586
        %v588 = vpop.f32.mrb[0].mxu0
        %v589 = vpop.f32.mrb[0].mxu0
        %v590 = vpop.f32.mrb[0].mxu0
        %591 = vmatprep.mubr.bf16.mxu0 0
        %592 = vmatmul.mubr.bf16.gmra.mrb[0].mxu0 %v520
        %v593 = vpop.f32.mrb[0].mxu0
        %v594 = vadd.f32 0.0, %v593
        %v595 = vpop.f32.mrb[0].mxu0
        %v596 = vpop.f32.mrb[0].mxu0
        %v597 = vpop.f32.mrb[0].mxu0
        %598 = vmatprep.mubr.bf16.mxu0 0
        %599 = vmatmul.mubr.bf16.gmra.mrb[0].mxu0 %v523
        %v600 = vpop.f32.mrb[0].mxu0
        %v601 = vadd.f32 0.0, %v600
        %v602 = vpop.f32.mrb[0].mxu0
        %v603 = vpop.f32.mrb[0].mxu0
        %v604 = vpop.f32.mrb[0].mxu0
        %605 = vmatprep.mubr.bf16.mxu0 0
        %606 = vmatmul.mubr.bf16.gmra.mrb[0].mxu0 %v526
        %v607 = vpop.f32.mrb[0].mxu0
        %v608 = vadd.f32 0.0, %v607
        %v609 = vpop.f32.mrb[0].mxu0
        %v610 = vpop.f32.mrb[0].mxu0
        %v611 = vpop.f32.mrb[0].mxu0
        %612 = vmatprep.mubr.bf16.mxu0 0
        %613 = vmatmul.mubr.bf16.gmra.mrb[0].mxu0 %v529
        %v614 = vpop.f32.mrb[0].mxu0
        %v615 = vadd.f32 0.0, %v614
        %v616 = vpop.f32.mrb[0].mxu0
        %v617 = vpop.f32.mrb[0].mxu0
        %v618 = vpop.f32.mrb[0].mxu0
        %619 = vdwg.mxu0
        %vm620 = vsmask.f32 256
        %v622 = vshrl.u32 %v477, 16
        %v624 = vrot.slane %v622, 7
        %v625 = vshrl.u32 %v478, 16
        %v627 = vrot.slane %v625, 7
        %v628 = vshll.u32 %v478, 16
        %v630 = vor.u32 %v627, %v628
        %v631 = vsel %vm620, %v624, %v630
        %v632 = vshrl.u32 %v479, 16
        %v634 = vrot.slane %v632, 7
        %v635 = vshll.u32 %v479, 16
        %v637 = vor.u32 %v634, %v635
        %v638 = vsel %vm620, %v627, %v637
        %v639 = vshrl.u32 %v480, 16
        %v641 = vrot.slane %v639, 7
        %v642 = vshll.u32 %v480, 16
        %v644 = vor.u32 %v641, %v642
        %v645 = vsel %vm620, %v634, %v644
        %v646 = vshrl.u32 %v481, 16
        %v648 = vrot.slane %v646, 7
        %v649 = vshll.u32 %v481, 16
        %v651 = vor.u32 %v648, %v649
        %v652 = vsel %vm620, %v641, %v651
        %v653 = vshrl.u32 %v482, 16
        %v655 = vrot.slane %v653, 7
        %v656 = vshll.u32 %v482, 16
        %v658 = vor.u32 %v655, %v656
        %v659 = vsel %vm620, %v648, %v658
        %v660 = vshrl.u32 %v483, 16
        %v662 = vrot.slane %v660, 7
        %v663 = vshll.u32 %v483, 16
        %v665 = vor.u32 %v662, %v663
        %v666 = vsel %vm620, %v655, %v665
        %v667 = vshrl.u32 %v484, 16
        %v669 = vrot.slane %v667, 7
        %v670 = vshll.u32 %v484, 16
        %v672 = vor.u32 %v669, %v670
        %v673 = vsel %vm620, %v662, %v672
        %v674 = vshrl.u32 %v485, 16
        %v676 = vrot.slane %v674, 7
        %v677 = vshll.u32 %v485, 16
        %v679 = vor.u32 %v676, %v677
        %v680 = vsel %vm620, %v669, %v679
        %v685 = vunpack.c.l.b16 %v486
        %v686 = vunpack.c.l.b16 %v487
        %v687 = vunpack.c.l.b16 %v488
        %v688 = vunpack.c.l.b16 %v489
        %v689 = vpack.c.b16 %v686, %v685
        %v690 = vpack.c.b16 %v688, %v687
        %v694 = vsel %vm374, %v631, 0
        %v697 = vsel %vm374, %v638, 0
        %v700 = vsel %vm374, %v645, 0
        %v703 = vsel %vm374, %v652, 0
        %v706 = vsel %vm374, %v659, 0
        %v709 = vsel %vm374, %v666, 0
        %v712 = vsel %vm374, %v673, 0
        %v715 = vsel %vm374, %v680, 0
        %717 = vmatprep.subr.bf16.mxu0 0
        %718 = vmatpush1.bf16.msra.mxu0 %v689
        %719 = vmatprep.subr.bf16.mxu0 0
        %720 = vmatpush1.bf16.msra.mxu0 %v690
        %721 = vmatprep.subr.bf16.mxu0 0
        %722 = vmatpush1.bf16.msra.mxu0 0
        %723 = vmatprep.subr.bf16.mxu0 0
        %724 = vmatpush1.bf16.msra.mxu0 0
        %725 = vmatprep.subr.bf16.mxu0 0
        %726 = vmatpush1.bf16.msra.mxu0 0
        %727 = vmatprep.subr.bf16.mxu0 0
        %728 = vmatpush1.bf16.msra.mxu0 0
        %729 = vmatprep.subr.bf16.mxu0 0
        %730 = vmatpush1.bf16.msra.mxu0 0
        %731 = vmatprep.subr.bf16.mxu0 0
        %732 = vmatpush1.bf16.msra.mxu0 0
        %733 = vmatprep.subr.bf16.mxu0 0
        %734 = vmatpush1.bf16.msra.mxu0 0
        %735 = vmatprep.subr.bf16.mxu0 0
        %736 = vmatpush1.bf16.msra.mxu0 0
        %737 = vmatprep.subr.bf16.mxu0 0
        %738 = vmatpush1.bf16.msra.mxu0 0
        %739 = vmatprep.subr.bf16.mxu0 0
        %740 = vmatpush1.bf16.msra.mxu0 0
        %741 = vmatprep.subr.bf16.mxu0 0
        %742 = vmatpush1.bf16.msra.mxu0 0
        %743 = vmatprep.subr.bf16.mxu0 0
        %744 = vmatpush1.bf16.msra.mxu0 0
        %745 = vmatprep.subr.bf16.mxu0 0
        %746 = vmatpush1.bf16.msra.mxu0 0
        %747 = vmatprep.subr.bf16.mxu0 0
        %748 = vmatpush1.bf16.msra.mxu0 0
        %749 = vmatprep.mubr.bf16.mxu0 0
        %750 = vmatmul.mubr.bf16.gmra.mrb[0].mxu0 %v694
        %v751 = vpop.f32.mrb[0].mxu0
        %v752 = vadd.f32 %v566, %v751
        %v753 = vpop.f32.mrb[0].mxu0
        %v754 = vpop.f32.mrb[0].mxu0
        %v755 = vpop.f32.mrb[0].mxu0
        %756 = vmatprep.mubr.bf16.mxu0 0
        %757 = vmatmul.mubr.bf16.gmra.mrb[0].mxu0 %v697
        %v758 = vpop.f32.mrb[0].mxu0
        %v759 = vadd.f32 %v573, %v758
        %v760 = vpop.f32.mrb[0].mxu0
        %v761 = vpop.f32.mrb[0].mxu0
        %v762 = vpop.f32.mrb[0].mxu0
        %763 = vmatprep.mubr.bf16.mxu0 0
        %764 = vmatmul.mubr.bf16.gmra.mrb[0].mxu0 %v700
        %v765 = vpop.f32.mrb[0].mxu0
        %v766 = vadd.f32 %v580, %v765
        %v767 = vpop.f32.mrb[0].mxu0
        %v768 = vpop.f32.mrb[0].mxu0
        %v769 = vpop.f32.mrb[0].mxu0
        %770 = vmatprep.mubr.bf16.mxu0 0
        %771 = vmatmul.mubr.bf16.gmra.mrb[0].mxu0 %v703
        %v772 = vpop.f32.mrb[0].mxu0
        %v773 = vadd.f32 %v587, %v772
        %v774 = vpop.f32.mrb[0].mxu0
        %v775 = vpop.f32.mrb[0].mxu0
        %v776 = vpop.f32.mrb[0].mxu0
        %777 = vmatprep.mubr.bf16.mxu0 0
        %778 = vmatmul.mubr.bf16.gmra.mrb[0].mxu0 %v706
        %v779 = vpop.f32.mrb[0].mxu0
        %v780 = vadd.f32 %v594, %v779
        %v781 = vpop.f32.mrb[0].mxu0
        %v782 = vpop.f32.mrb[0].mxu0
        %v783 = vpop.f32.mrb[0].mxu0
        %784 = vmatprep.mubr.bf16.mxu0 0
        %785 = vmatmul.mubr.bf16.gmra.mrb[0].mxu0 %v709
        %v786 = vpop.f32.mrb[0].mxu0
        %v787 = vadd.f32 %v601, %v786
        %v788 = vpop.f32.mrb[0].mxu0
        %v789 = vpop.f32.mrb[0].mxu0
        %v790 = vpop.f32.mrb[0].mxu0
        %791 = vmatprep.mubr.bf16.mxu0 0
        %792 = vmatmul.mubr.bf16.gmra.mrb[0].mxu0 %v712
        %v793 = vpop.f32.mrb[0].mxu0
        %v794 = vadd.f32 %v608, %v793
        %v795 = vpop.f32.mrb[0].mxu0
        %v796 = vpop.f32.mrb[0].mxu0
        %v797 = vpop.f32.mrb[0].mxu0
        %798 = vmatprep.mubr.bf16.mxu0 0
        %799 = vmatmul.mubr.bf16.gmra.mrb[0].mxu0 %v715
        %v800 = vpop.f32.mrb[0].mxu0
        %v801 = vadd.f32 %v615, %v800
        %v802 = vpop.f32.mrb[0].mxu0
        %v803 = vpop.f32.mrb[0].mxu0
        %v804 = vpop.f32.mrb[0].mxu0
        %805 = vdwg.mxu0
        %v806 = vld [vmem:[#allocation2 + $0x8] sm:$0xff]
        %v807 = vld [vmem:[#allocation2 + $0x10] sm:$0xff]
        %v808 = vld [vmem:[#allocation2 + $0x18] sm:$0xff]
        %v809 = vld [vmem:[#allocation2 + $0x20] sm:$0xff]
        %v810 = vld [vmem:[#allocation2 + $0x28] sm:$0xff]
        %v811 = vld [vmem:[#allocation2 + $0x30] sm:$0xff]
        %v812 = vld [vmem:[#allocation2 + $0x38] sm:$0xff]
        %v813 = vld [vmem:[#allocation2 + $0x40] sm:$0xff]
        %v814 = vld [vmem:[#allocation2 + $0x48] sm:$0x1]
        %s815 = scalar_lea.vmem [#allocation9], 32
        %v816 = vld [vmem:[%s815] sm:$0xf]
        %v817 = vld [vmem:[%s815 + $0x4] sm:$0xf]
        %v818 = vld [vmem:[%s815 + $0x8] sm:$0xf]
        %v819 = vld [vmem:[%s815 + $0xc] sm:$0xf]
        %vm820 = vsmask.f32 7424
        %v822 = vshrl.u32 %v806, 16
        %v824 = vshll.u32 %v806, 16
        %v826 = vrot.slane %v824, 1
        %v827 = vor.u32 %v822, %v826
        %v829 = vshll.u32 %v807, 16
        %v831 = vrot.slane %v829, 1
        %v832 = vsel %vm820, %v827, %v831
        %v833 = vshrl.u32 %v807, 16
        %v835 = vor.u32 %v833, %v831
        %v837 = vshll.u32 %v808, 16
        %v839 = vrot.slane %v837, 1
        %v840 = vsel %vm820, %v835, %v839
        %v841 = vshrl.u32 %v808, 16
        %v843 = vor.u32 %v841, %v839
        %v845 = vshll.u32 %v809, 16
        %v847 = vrot.slane %v845, 1
        %v848 = vsel %vm820, %v843, %v847
        %v849 = vshrl.u32 %v809, 16
        %v851 = vor.u32 %v849, %v847
        %v853 = vshll.u32 %v810, 16
        %v855 = vrot.slane %v853, 1
        %v856 = vsel %vm820, %v851, %v855
        %v857 = vshrl.u32 %v810, 16
        %v859 = vor.u32 %v857, %v855
        %v861 = vshll.u32 %v811, 16
        %v863 = vrot.slane %v861, 1
        %v864 = vsel %vm820, %v859, %v863
        %v865 = vshrl.u32 %v811, 16
        %v867 = vor.u32 %v865, %v863
        %v869 = vshll.u32 %v812, 16
        %v871 = vrot.slane %v869, 1
        %v872 = vsel %vm820, %v867, %v871
        %v873 = vshrl.u32 %v812, 16
        %v875 = vor.u32 %v873, %v871
        %v877 = vshll.u32 %v813, 16
        %v879 = vrot.slane %v877, 1
        %v880 = vsel %vm820, %v875, %v879
        %v881 = vshrl.u32 %v813, 16
        %v883 = vor.u32 %v881, %v879
        %v885 = vshll.u32 %v814, 16
        %v887 = vrot.slane %v885, 1
        %v888 = vsel %vm820, %v883, %v887
        %v893 = vunpack.c.l.b16 %v816
        %v894 = vunpack.c.l.b16 %v817
        %v895 = vunpack.c.l.b16 %v818
        %v896 = vunpack.c.l.b16 %v819
        %v897 = vpack.c.b16 %v894, %v893
        %v898 = vpack.c.b16 %v896, %v895
        %v902 = vsel %vm374, %v832, 0
        %v905 = vsel %vm374, %v840, 0
        %v908 = vsel %vm374, %v848, 0
        %v911 = vsel %vm374, %v856, 0
        %v914 = vsel %vm374, %v864, 0
        %v917 = vsel %vm374, %v872, 0
        %v920 = vsel %vm374, %v880, 0
        %v923 = vsel %vm374, %v888, 0
        %925 = vmatprep.subr.bf16.mxu0 0
        %926 = vmatpush1.bf16.msra.mxu0 %v897
        %927 = vmatprep.subr.bf16.mxu0 0
        %928 = vmatpush1.bf16.msra.mxu0 %v898
        %929 = vmatprep.subr.bf16.mxu0 0
        %930 = vmatpush1.bf16.msra.mxu0 0
        %931 = vmatprep.subr.bf16.mxu0 0
        %932 = vmatpush1.bf16.msra.mxu0 0
        %933 = vmatprep.subr.bf16.mxu0 0
        %934 = vmatpush1.bf16.msra.mxu0 0
        %935 = vmatprep.subr.bf16.mxu0 0
        %936 = vmatpush1.bf16.msra.mxu0 0
        %937 = vmatprep.subr.bf16.mxu0 0
        %938 = vmatpush1.bf16.msra.mxu0 0
        %939 = vmatprep.subr.bf16.mxu0 0
        %940 = vmatpush1.bf16.msra.mxu0 0
        %941 = vmatprep.subr.bf16.mxu0 0
        %942 = vmatpush1.bf16.msra.mxu0 0
        %943 = vmatprep.subr.bf16.mxu0 0
        %944 = vmatpush1.bf16.msra.mxu0 0
        %945 = vmatprep.subr.bf16.mxu0 0
        %946 = vmatpush1.bf16.msra.mxu0 0
        %947 = vmatprep.subr.bf16.mxu0 0
        %948 = vmatpush1.bf16.msra.mxu0 0
        %949 = vmatprep.subr.bf16.mxu0 0
        %950 = vmatpush1.bf16.msra.mxu0 0
        %951 = vmatprep.subr.bf16.mxu0 0
        %952 = vmatpush1.bf16.msra.mxu0 0
        %953 = vmatprep.subr.bf16.mxu0 0
        %954 = vmatpush1.bf16.msra.mxu0 0
        %955 = vmatprep.subr.bf16.mxu0 0
        %956 = vmatpush1.bf16.msra.mxu0 0
        %957 = vmatprep.mubr.bf16.mxu0 0
        %958 = vmatmul.mubr.bf16.gmra.mrb[0].mxu0 %v902
        %v959 = vpop.f32.mrb[0].mxu0
        %v960 = vadd.f32 0.0, %v959
        %v961 = vpop.f32.mrb[0].mxu0
        %v962 = vpop.f32.mrb[0].mxu0
        %v963 = vpop.f32.mrb[0].mxu0
        %964 = vmatprep.mubr.bf16.mxu0 0
        %965 = vmatmul.mubr.bf16.gmra.mrb[0].mxu0 %v905
        %v966 = vpop.f32.mrb[0].mxu0
        %v967 = vadd.f32 0.0, %v966
        %v968 = vpop.f32.mrb[0].mxu0
        %v969 = vpop.f32.mrb[0].mxu0
        %v970 = vpop.f32.mrb[0].mxu0
        %971 = vmatprep.mubr.bf16.mxu0 0
        %972 = vmatmul.mubr.bf16.gmra.mrb[0].mxu0 %v908
        %v973 = vpop.f32.mrb[0].mxu0
        %v974 = vadd.f32 0.0, %v973
        %v975 = vpop.f32.mrb[0].mxu0
        %v976 = vpop.f32.mrb[0].mxu0
        %v977 = vpop.f32.mrb[0].mxu0
        %978 = vmatprep.mubr.bf16.mxu0 0
        %979 = vmatmul.mubr.bf16.gmra.mrb[0].mxu0 %v911
        %v980 = vpop.f32.mrb[0].mxu0
        %v981 = vadd.f32 0.0, %v980
        %v982 = vpop.f32.mrb[0].mxu0
        %v983 = vpop.f32.mrb[0].mxu0
        %v984 = vpop.f32.mrb[0].mxu0
        %985 = vmatprep.mubr.bf16.mxu0 0
        %986 = vmatmul.mubr.bf16.gmra.mrb[0].mxu0 %v914
        %v987 = vpop.f32.mrb[0].mxu0
        %v988 = vadd.f32 0.0, %v987
        %v989 = vpop.f32.mrb[0].mxu0
        %v990 = vpop.f32.mrb[0].mxu0
        %v991 = vpop.f32.mrb[0].mxu0
        %992 = vmatprep.mubr.bf16.mxu0 0
        %993 = vmatmul.mubr.bf16.gmra.mrb[0].mxu0 %v917
        %v994 = vpop.f32.mrb[0].mxu0
        %v995 = vadd.f32 0.0, %v994
        %v996 = vpop.f32.mrb[0].mxu0
        %v997 = vpop.f32.mrb[0].mxu0
        %v998 = vpop.f32.mrb[0].mxu0
        %999 = vmatprep.mubr.bf16.mxu0 0
        %1000 = vmatmul.mubr.bf16.gmra.mrb[0].mxu0 %v920
        %v1001 = vpop.f32.mrb[0].mxu0
        %v1002 = vadd.f32 0.0, %v1001
        %v1003 = vpop.f32.mrb[0].mxu0
        %v1004 = vpop.f32.mrb[0].mxu0
        %v1005 = vpop.f32.mrb[0].mxu0
        %1006 = vmatprep.mubr.bf16.mxu0 0
        %1007 = vmatmul.mubr.bf16.gmra.mrb[0].mxu0 %v923
        %v1008 = vpop.f32.mrb[0].mxu0
        %v1009 = vadd.f32 0.0, %v1008
        %v1010 = vpop.f32.mrb[0].mxu0
        %v1011 = vpop.f32.mrb[0].mxu0
        %v1012 = vpop.f32.mrb[0].mxu0
        %1013 = vdwg.mxu0
        %v1014 = vadd.f32 %v752, %v960
        %v1015 = vadd.f32 %v759, %v967
        %v1016 = vadd.f32 %v766, %v974
        %v1017 = vadd.f32 %v773, %v981
        %v1018 = vadd.f32 %v780, %v988
        %v1019 = vadd.f32 %v787, %v995
        %v1020 = vadd.f32 %v794, %v1002
        %v1021 = vadd.f32 %v801, %v1009
        %v1022 = vld [vmem:[#allocation2 + $0x8] sm:$0x80]
        %v1023 = vld [vmem:[#allocation2 + $0x48] sm:$0xff]
        %s1024 = scalar_lea.vmem [#allocation9], 48
        %v1025 = vld [vmem:[%s1024] sm:$0xf]
        %v1026 = vld [vmem:[%s1024 + $0x4] sm:$0xf]
        %v1027 = vld [vmem:[%s1024 + $0x8] sm:$0xf]
        %v1028 = vld [vmem:[%s1024 + $0xc] sm:$0xf]
        %v1030 = vshrl.u32 %v1022, 16
        %v1032 = vrot.slane %v1030, 7
        %v1033 = vrot.slane %v833, 7
        %v1034 = vor.u32 %v1033, %v829
        %v1035 = vsel %vm620, %v1032, %v1034
        %v1036 = vrot.slane %v841, 7
        %v1037 = vor.u32 %v1036, %v837
        %v1038 = vsel %vm620, %v1033, %v1037
        %v1039 = vrot.slane %v849, 7
        %v1040 = vor.u32 %v1039, %v845
        %v1041 = vsel %vm620, %v1036, %v1040
        %v1042 = vrot.slane %v857, 7
        %v1043 = vor.u32 %v1042, %v853
        %v1044 = vsel %vm620, %v1039, %v1043
        %v1045 = vrot.slane %v865, 7
        %v1046 = vor.u32 %v1045, %v861
        %v1047 = vsel %vm620, %v1042, %v1046
        %v1048 = vrot.slane %v873, 7
        %v1049 = vor.u32 %v1048, %v869
        %v1050 = vsel %vm620, %v1045, %v1049
        %v1051 = vrot.slane %v881, 7
        %v1052 = vor.u32 %v1051, %v877
        %v1053 = vsel %vm620, %v1048, %v1052
        %v1055 = vshrl.u32 %v1023, 16
        %v1057 = vrot.slane %v1055, 7
        %v1058 = vshll.u32 %v1023, 16
        %v1060 = vor.u32 %v1057, %v1058
        %v1061 = vsel %vm620, %v1051, %v1060
        %v1066 = vunpack.c.l.b16 %v1025
        %v1067 = vunpack.c.l.b16 %v1026
        %v1068 = vunpack.c.l.b16 %v1027
        %v1069 = vunpack.c.l.b16 %v1028
        %v1070 = vpack.c.b16 %v1067, %v1066
        %v1071 = vpack.c.b16 %v1069, %v1068
        %v1075 = vsel %vm374, %v1035, 0
        %v1078 = vsel %vm374, %v1038, 0
        %v1081 = vsel %vm374, %v1041, 0
        %v1084 = vsel %vm374, %v1044, 0
        %v1087 = vsel %vm374, %v1047, 0
        %v1090 = vsel %vm374, %v1050, 0
        %v1093 = vsel %vm374, %v1053, 0
        %v1096 = vsel %vm374, %v1061, 0
        %1098 = vmatprep.subr.bf16.mxu0 0
        %1099 = vmatpush1.bf16.msra.mxu0 %v1070
        %1100 = vmatprep.subr.bf16.mxu0 0
        %1101 = vmatpush1.bf16.msra.mxu0 %v1071
        %1102 = vmatprep.subr.bf16.mxu0 0
        %1103 = vmatpush1.bf16.msra.mxu0 0
        %1104 = vmatprep.subr.bf16.mxu0 0
        %1105 = vmatpush1.bf16.msra.mxu0 0
        %1106 = vmatprep.subr.bf16.mxu0 0
        %1107 = vmatpush1.bf16.msra.mxu0 0
        %1108 = vmatprep.subr.bf16.mxu0 0
        %1109 = vmatpush1.bf16.msra.mxu0 0
        %1110 = vmatprep.subr.bf16.mxu0 0
        %1111 = vmatpush1.bf16.msra.mxu0 0
        %1112 = vmatprep.subr.bf16.mxu0 0
        %1113 = vmatpush1.bf16.msra.mxu0 0
        %1114 = vmatprep.subr.bf16.mxu0 0
        %1115 = vmatpush1.bf16.msra.mxu0 0
        %1116 = vmatprep.subr.bf16.mxu0 0
        %1117 = vmatpush1.bf16.msra.mxu0 0
        %1118 = vmatprep.subr.bf16.mxu0 0
        %1119 = vmatpush1.bf16.msra.mxu0 0
        %1120 = vmatprep.subr.bf16.mxu0 0
        %1121 = vmatpush1.bf16.msra.mxu0 0
        %1122 = vmatprep.subr.bf16.mxu0 0
        %1123 = vmatpush1.bf16.msra.mxu0 0
        %1124 = vmatprep.subr.bf16.mxu0 0
        %1125 = vmatpush1.bf16.msra.mxu0 0
        %1126 = vmatprep.subr.bf16.mxu0 0
        %1127 = vmatpush1.bf16.msra.mxu0 0
        %1128 = vmatprep.subr.bf16.mxu0 0
        %1129 = vmatpush1.bf16.msra.mxu0 0
        %1130 = vmatprep.mubr.bf16.mxu0 0
        %1131 = vmatmul.mubr.bf16.gmra.mrb[0].mxu0 %v1075
        %v1132 = vpop.f32.mrb[0].mxu0
        %v1133 = vadd.f32 0.0, %v1132
        %v1134 = vpop.f32.mrb[0].mxu0
        %v1135 = vpop.f32.mrb[0].mxu0
        %v1136 = vpop.f32.mrb[0].mxu0
        %1137 = vmatprep.mubr.bf16.mxu0 0
        %1138 = vmatmul.mubr.bf16.gmra.mrb[0].mxu0 %v1078
        %v1139 = vpop.f32.mrb[0].mxu0
        %v1140 = vadd.f32 0.0, %v1139
        %v1141 = vpop.f32.mrb[0].mxu0
        %v1142 = vpop.f32.mrb[0].mxu0
        %v1143 = vpop.f32.mrb[0].mxu0
        %1144 = vmatprep.mubr.bf16.mxu0 0
        %1145 = vmatmul.mubr.bf16.gmra.mrb[0].mxu0 %v1081
        %v1146 = vpop.f32.mrb[0].mxu0
        %v1147 = vadd.f32 0.0, %v1146
        %v1148 = vpop.f32.mrb[0].mxu0
        %v1149 = vpop.f32.mrb[0].mxu0
        %v1150 = vpop.f32.mrb[0].mxu0
        %1151 = vmatprep.mubr.bf16.mxu0 0
        %1152 = vmatmul.mubr.bf16.gmra.mrb[0].mxu0 %v1084
        %v1153 = vpop.f32.mrb[0].mxu0
        %v1154 = vadd.f32 0.0, %v1153
        %v1155 = vpop.f32.mrb[0].mxu0
        %v1156 = vpop.f32.mrb[0].mxu0
        %v1157 = vpop.f32.mrb[0].mxu0
        %1158 = vmatprep.mubr.bf16.mxu0 0
        %1159 = vmatmul.mubr.bf16.gmra.mrb[0].mxu0 %v1087
        %v1160 = vpop.f32.mrb[0].mxu0
        %v1161 = vadd.f32 0.0, %v1160
        %v1162 = vpop.f32.mrb[0].mxu0
        %v1163 = vpop.f32.mrb[0].mxu0
        %v1164 = vpop.f32.mrb[0].mxu0
        %1165 = vmatprep.mubr.bf16.mxu0 0
        %1166 = vmatmul.mubr.bf16.gmra.mrb[0].mxu0 %v1090
        %v1167 = vpop.f32.mrb[0].mxu0
        %v1168 = vadd.f32 0.0, %v1167
        %v1169 = vpop.f32.mrb[0].mxu0
        %v1170 = vpop.f32.mrb[0].mxu0
        %v1171 = vpop.f32.mrb[0].mxu0
        %1172 = vmatprep.mubr.bf16.mxu0 0
        %1173 = vmatmul.mubr.bf16.gmra.mrb[0].mxu0 %v1093
        %v1174 = vpop.f32.mrb[0].mxu0
        %v1175 = vadd.f32 0.0, %v1174
        %v1176 = vpop.f32.mrb[0].mxu0
        %v1177 = vpop.f32.mrb[0].mxu0
        %v1178 = vpop.f32.mrb[0].mxu0
        %1179 = vmatprep.mubr.bf16.mxu0 0
        %1180 = vmatmul.mubr.bf16.gmra.mrb[0].mxu0 %v1096
        %v1181 = vpop.f32.mrb[0].mxu0
        %v1182 = vadd.f32 0.0, %v1181
        %v1183 = vpop.f32.mrb[0].mxu0
        %v1184 = vpop.f32.mrb[0].mxu0
        %v1185 = vpop.f32.mrb[0].mxu0
        %1186 = vdwg.mxu0
        %v1187 = vadd.f32 %v1014, %v1133
        %v1188 = vadd.f32 %v1015, %v1140
        %v1189 = vadd.f32 %v1016, %v1147
        %v1190 = vadd.f32 %v1017, %v1154
        %v1191 = vadd.f32 %v1018, %v1161
        %v1192 = vadd.f32 %v1019, %v1168
        %v1193 = vadd.f32 %v1020, %v1175
        %v1194 = vadd.f32 %v1021, %v1182
        %s1195 = scalar_lea.vmem [#allocation9], 64
        %v1196 = vld [vmem:[%s1195] sm:$0xf]
        %v1197 = vld [vmem:[%s1195 + $0x4] sm:$0xf]
        %v1198 = vld [vmem:[%s1195 + $0x8] sm:$0xf]
        %v1199 = vld [vmem:[%s1195 + $0xc] sm:$0xf]
        %v1204 = vunpack.c.l.b16 %v1196
        %v1205 = vunpack.c.l.b16 %v1197
        %v1206 = vunpack.c.l.b16 %v1198
        %v1207 = vunpack.c.l.b16 %v1199
        %v1208 = vpack.c.b16 %v1205, %v1204
        %v1209 = vpack.c.b16 %v1207, %v1206
        %v1212 = vsel %vm374, %v807, 0
        %v1214 = vsel %vm374, %v808, 0
        %v1216 = vsel %vm374, %v809, 0
        %v1218 = vsel %vm374, %v810, 0
        %v1220 = vsel %vm374, %v811, 0
        %v1222 = vsel %vm374, %v812, 0
        %v1224 = vsel %vm374, %v813, 0
        %v1226 = vsel %vm374, %v1023, 0
        %1228 = vmatprep.subr.bf16.mxu0 0
        %1229 = vmatpush1.bf16.msra.mxu0 %v1208
        %1230 = vmatprep.subr.bf16.mxu0 0
        %1231 = vmatpush1.bf16.msra.mxu0 %v1209
        %1232 = vmatprep.subr.bf16.mxu0 0
        %1233 = vmatpush1.bf16.msra.mxu0 0
        %1234 = vmatprep.subr.bf16.mxu0 0
        %1235 = vmatpush1.bf16.msra.mxu0 0
        %1236 = vmatprep.subr.bf16.mxu0 0
        %1237 = vmatpush1.bf16.msra.mxu0 0
        %1238 = vmatprep.subr.bf16.mxu0 0
        %1239 = vmatpush1.bf16.msra.mxu0 0
        %1240 = vmatprep.subr.bf16.mxu0 0
        %1241 = vmatpush1.bf16.msra.mxu0 0
        %1242 = vmatprep.subr.bf16.mxu0 0
        %1243 = vmatpush1.bf16.msra.mxu0 0
        %1244 = vmatprep.subr.bf16.mxu0 0
        %1245 = vmatpush1.bf16.msra.mxu0 0
        %1246 = vmatprep.subr.bf16.mxu0 0
        %1247 = vmatpush1.bf16.msra.mxu0 0
        %1248 = vmatprep.subr.bf16.mxu0 0
        %1249 = vmatpush1.bf16.msra.mxu0 0
        %1250 = vmatprep.subr.bf16.mxu0 0
        %1251 = vmatpush1.bf16.msra.mxu0 0
        %1252 = vmatprep.subr.bf16.mxu0 0
        %1253 = vmatpush1.bf16.msra.mxu0 0
        %1254 = vmatprep.subr.bf16.mxu0 0
        %1255 = vmatpush1.bf16.msra.mxu0 0
        %1256 = vmatprep.subr.bf16.mxu0 0
        %1257 = vmatpush1.bf16.msra.mxu0 0
        %1258 = vmatprep.subr.bf16.mxu0 0
        %1259 = vmatpush1.bf16.msra.mxu0 0
        %1260 = vmatprep.mubr.bf16.mxu0 0
        %1261 = vmatmul.mubr.bf16.gmra.mrb[0].mxu0 %v1212
        %v1262 = vpop.f32.mrb[0].mxu0
        %v1263 = vadd.f32 0.0, %v1262
        %v1264 = vpop.f32.mrb[0].mxu0
        %v1265 = vpop.f32.mrb[0].mxu0
        %v1266 = vpop.f32.mrb[0].mxu0
        %1267 = vmatprep.mubr.bf16.mxu0 0
        %1268 = vmatmul.mubr.bf16.gmra.mrb[0].mxu0 %v1214
        %v1269 = vpop.f32.mrb[0].mxu0
        %v1270 = vadd.f32 0.0, %v1269
        %v1271 = vpop.f32.mrb[0].mxu0
        %v1272 = vpop.f32.mrb[0].mxu0
        %v1273 = vpop.f32.mrb[0].mxu0
        %1274 = vmatprep.mubr.bf16.mxu0 0
        %1275 = vmatmul.mubr.bf16.gmra.mrb[0].mxu0 %v1216
        %v1276 = vpop.f32.mrb[0].mxu0
        %v1277 = vadd.f32 0.0, %v1276
        %v1278 = vpop.f32.mrb[0].mxu0
        %v1279 = vpop.f32.mrb[0].mxu0
        %v1280 = vpop.f32.mrb[0].mxu0
        %1281 = vmatprep.mubr.bf16.mxu0 0
        %1282 = vmatmul.mubr.bf16.gmra.mrb[0].mxu0 %v1218
        %v1283 = vpop.f32.mrb[0].mxu0
        %v1284 = vadd.f32 0.0, %v1283
        %v1285 = vpop.f32.mrb[0].mxu0
        %v1286 = vpop.f32.mrb[0].mxu0
        %v1287 = vpop.f32.mrb[0].mxu0
        %1288 = vmatprep.mubr.bf16.mxu0 0
        %1289 = vmatmul.mubr.bf16.gmra.mrb[0].mxu0 %v1220
        %v1290 = vpop.f32.mrb[0].mxu0
        %v1291 = vadd.f32 0.0, %v1290
        %v1292 = vpop.f32.mrb[0].mxu0
        %v1293 = vpop.f32.mrb[0].mxu0
        %v1294 = vpop.f32.mrb[0].mxu0
        %1295 = vmatprep.mubr.bf16.mxu0 0
        %1296 = vmatmul.mubr.bf16.gmra.mrb[0].mxu0 %v1222
        %v1297 = vpop.f32.mrb[0].mxu0
        %v1298 = vadd.f32 0.0, %v1297
        %v1299 = vpop.f32.mrb[0].mxu0
        %v1300 = vpop.f32.mrb[0].mxu0
        %v1301 = vpop.f32.mrb[0].mxu0
        %1302 = vmatprep.mubr.bf16.mxu0 0
        %1303 = vmatmul.mubr.bf16.gmra.mrb[0].mxu0 %v1224
        %v1304 = vpop.f32.mrb[0].mxu0
        %v1305 = vadd.f32 0.0, %v1304
        %v1306 = vpop.f32.mrb[0].mxu0
        %v1307 = vpop.f32.mrb[0].mxu0
        %v1308 = vpop.f32.mrb[0].mxu0
        %1309 = vmatprep.mubr.bf16.mxu0 0
        %1310 = vmatmul.mubr.bf16.gmra.mrb[0].mxu0 %v1226
        %v1311 = vpop.f32.mrb[0].mxu0
        %v1312 = vadd.f32 0.0, %v1311
        %v1313 = vpop.f32.mrb[0].mxu0
        %v1314 = vpop.f32.mrb[0].mxu0
        %v1315 = vpop.f32.mrb[0].mxu0
        %1316 = vdwg.mxu0
        %v1317 = vadd.f32 %v1187, %v1263
        %v1318 = vadd.f32 %v1188, %v1270
        %v1319 = vadd.f32 %v1189, %v1277
        %v1320 = vadd.f32 %v1190, %v1284
        %v1321 = vadd.f32 %v1191, %v1291
        %v1322 = vadd.f32 %v1192, %v1298
        %v1323 = vadd.f32 %v1193, %v1305
        %v1324 = vadd.f32 %v1194, %v1312
        %v1325 = vld [vmem:[#allocation2 + $0x10] sm:$0xff]
        %v1326 = vld [vmem:[#allocation2 + $0x18] sm:$0xff]
        %v1327 = vld [vmem:[#allocation2 + $0x20] sm:$0xff]
        %v1328 = vld [vmem:[#allocation2 + $0x28] sm:$0xff]
        %v1329 = vld [vmem:[#allocation2 + $0x30] sm:$0xff]
        %v1330 = vld [vmem:[#allocation2 + $0x38] sm:$0xff]
        %v1331 = vld [vmem:[#allocation2 + $0x40] sm:$0xff]
        %v1332 = vld [vmem:[#allocation2 + $0x48] sm:$0xff]
        %v1333 = vld [vmem:[#allocation2 + $0x50] sm:$0x1]
        %s1334 = scalar_lea.vmem [#allocation9], 80
        %v1335 = vld [vmem:[%s1334] sm:$0xf]
        %v1336 = vld [vmem:[%s1334 + $0x4] sm:$0xf]
        %v1337 = vld [vmem:[%s1334 + $0x8] sm:$0xf]
        %v1338 = vld [vmem:[%s1334 + $0xc] sm:$0xf]
        %v1340 = vshrl.u32 %v1325, 16
        %v1342 = vshll.u32 %v1325, 16
        %v1344 = vrot.slane %v1342, 1
        %v1345 = vor.u32 %v1340, %v1344
        %v1347 = vshll.u32 %v1326, 16
        %v1349 = vrot.slane %v1347, 1
        %v1350 = vsel %vm820, %v1345, %v1349
        %v1351 = vshrl.u32 %v1326, 16
        %v1353 = vor.u32 %v1351, %v1349
        %v1355 = vshll.u32 %v1327, 16
        %v1357 = vrot.slane %v1355, 1
        %v1358 = vsel %vm820, %v1353, %v1357
        %v1359 = vshrl.u32 %v1327, 16
        %v1361 = vor.u32 %v1359, %v1357
        %v1363 = vshll.u32 %v1328, 16
        %v1365 = vrot.slane %v1363, 1
        %v1366 = vsel %vm820, %v1361, %v1365
        %v1367 = vshrl.u32 %v1328, 16
        %v1369 = vor.u32 %v1367, %v1365
        %v1371 = vshll.u32 %v1329, 16
        %v1373 = vrot.slane %v1371, 1
        %v1374 = vsel %vm820, %v1369, %v1373
        %v1375 = vshrl.u32 %v1329, 16
        %v1377 = vor.u32 %v1375, %v1373
        %v1379 = vshll.u32 %v1330, 16
        %v1381 = vrot.slane %v1379, 1
        %v1382 = vsel %vm820, %v1377, %v1381
        %v1383 = vshrl.u32 %v1330, 16
        %v1385 = vor.u32 %v1383, %v1381
        %v1387 = vshll.u32 %v1331, 16
        %v1389 = vrot.slane %v1387, 1
        %v1390 = vsel %vm820, %v1385, %v1389
        %v1391 = vshrl.u32 %v1331, 16
        %v1393 = vor.u32 %v1391, %v1389
        %v1395 = vshll.u32 %v1332, 16
        %v1397 = vrot.slane %v1395, 1
        %v1398 = vsel %vm820, %v1393, %v1397
        %v1399 = vshrl.u32 %v1332, 16
        %v1401 = vor.u32 %v1399, %v1397
        %v1403 = vshll.u32 %v1333, 16
        %v1405 = vrot.slane %v1403, 1
        %v1406 = vsel %vm820, %v1401, %v1405
        %v1411 = vunpack.c.l.b16 %v1335
        %v1412 = vunpack.c.l.b16 %v1336
        %v1413 = vunpack.c.l.b16 %v1337
        %v1414 = vunpack.c.l.b16 %v1338
        %v1415 = vpack.c.b16 %v1412, %v1411
        %v1416 = vpack.c.b16 %v1414, %v1413
        %v1420 = vsel %vm374, %v1350, 0
        %v1423 = vsel %vm374, %v1358, 0
        %v1426 = vsel %vm374, %v1366, 0
        %v1429 = vsel %vm374, %v1374, 0
        %v1432 = vsel %vm374, %v1382, 0
        %v1435 = vsel %vm374, %v1390, 0
        %v1438 = vsel %vm374, %v1398, 0
        %v1441 = vsel %vm374, %v1406, 0
        %1443 = vmatprep.subr.bf16.mxu0 0
        %1444 = vmatpush1.bf16.msra.mxu0 %v1415
        %1445 = vmatprep.subr.bf16.mxu0 0
        %1446 = vmatpush1.bf16.msra.mxu0 %v1416
        %1447 = vmatprep.subr.bf16.mxu0 0
        %1448 = vmatpush1.bf16.msra.mxu0 0
        %1449 = vmatprep.subr.bf16.mxu0 0
        %1450 = vmatpush1.bf16.msra.mxu0 0
        %1451 = vmatprep.subr.bf16.mxu0 0
        %1452 = vmatpush1.bf16.msra.mxu0 0
        %1453 = vmatprep.subr.bf16.mxu0 0
        %1454 = vmatpush1.bf16.msra.mxu0 0
        %1455 = vmatprep.subr.bf16.mxu0 0
        %1456 = vmatpush1.bf16.msra.mxu0 0
        %1457 = vmatprep.subr.bf16.mxu0 0
        %1458 = vmatpush1.bf16.msra.mxu0 0
        %1459 = vmatprep.subr.bf16.mxu0 0
        %1460 = vmatpush1.bf16.msra.mxu0 0
        %1461 = vmatprep.subr.bf16.mxu0 0
        %1462 = vmatpush1.bf16.msra.mxu0 0
        %1463 = vmatprep.subr.bf16.mxu0 0
        %1464 = vmatpush1.bf16.msra.mxu0 0
        %1465 = vmatprep.subr.bf16.mxu0 0
        %1466 = vmatpush1.bf16.msra.mxu0 0
        %1467 = vmatprep.subr.bf16.mxu0 0
        %1468 = vmatpush1.bf16.msra.mxu0 0
        %1469 = vmatprep.subr.bf16.mxu0 0
        %1470 = vmatpush1.bf16.msra.mxu0 0
        %1471 = vmatprep.subr.bf16.mxu0 0
        %1472 = vmatpush1.bf16.msra.mxu0 0
        %1473 = vmatprep.subr.bf16.mxu0 0
        %1474 = vmatpush1.bf16.msra.mxu0 0
        %1475 = vmatprep.mubr.bf16.mxu0 0
        %1476 = vmatmul.mubr.bf16.gmra.mrb[0].mxu0 %v1420
        %v1477 = vpop.f32.mrb[0].mxu0
        %v1478 = vadd.f32 0.0, %v1477
        %v1479 = vpop.f32.mrb[0].mxu0
        %v1480 = vpop.f32.mrb[0].mxu0
        %v1481 = vpop.f32.mrb[0].mxu0
        %1482 = vmatprep.mubr.bf16.mxu0 0
        %1483 = vmatmul.mubr.bf16.gmra.mrb[0].mxu0 %v1423
        %v1484 = vpop.f32.mrb[0].mxu0
        %v1485 = vadd.f32 0.0, %v1484
        %v1486 = vpop.f32.mrb[0].mxu0
        %v1487 = vpop.f32.mrb[0].mxu0
        %v1488 = vpop.f32.mrb[0].mxu0
        %1489 = vmatprep.mubr.bf16.mxu0 0
        %1490 = vmatmul.mubr.bf16.gmra.mrb[0].mxu0 %v1426
        %v1491 = vpop.f32.mrb[0].mxu0
        %v1492 = vadd.f32 0.0, %v1491
        %v1493 = vpop.f32.mrb[0].mxu0
        %v1494 = vpop.f32.mrb[0].mxu0
        %v1495 = vpop.f32.mrb[0].mxu0
        %1496 = vmatprep.mubr.bf16.mxu0 0
        %1497 = vmatmul.mubr.bf16.gmra.mrb[0].mxu0 %v1429
        %v1498 = vpop.f32.mrb[0].mxu0
        %v1499 = vadd.f32 0.0, %v1498
        %v1500 = vpop.f32.mrb[0].mxu0
        %v1501 = vpop.f32.mrb[0].mxu0
        %v1502 = vpop.f32.mrb[0].mxu0
        %1503 = vmatprep.mubr.bf16.mxu0 0
        %1504 = vmatmul.mubr.bf16.gmra.mrb[0].mxu0 %v1432
        %v1505 = vpop.f32.mrb[0].mxu0
        %v1506 = vadd.f32 0.0, %v1505
        %v1507 = vpop.f32.mrb[0].mxu0
        %v1508 = vpop.f32.mrb[0].mxu0
        %v1509 = vpop.f32.mrb[0].mxu0
        %1510 = vmatprep.mubr.bf16.mxu0 0
        %1511 = vmatmul.mubr.bf16.gmra.mrb[0].mxu0 %v1435
        %v1512 = vpop.f32.mrb[0].mxu0
        %v1513 = vadd.f32 0.0, %v1512
        %v1514 = vpop.f32.mrb[0].mxu0
        %v1515 = vpop.f32.mrb[0].mxu0
        %v1516 = vpop.f32.mrb[0].mxu0
        %1517 = vmatprep.mubr.bf16.mxu0 0
        %1518 = vmatmul.mubr.bf16.gmra.mrb[0].mxu0 %v1438
        %v1519 = vpop.f32.mrb[0].mxu0
        %v1520 = vadd.f32 0.0, %v1519
        %v1521 = vpop.f32.mrb[0].mxu0
        %v1522 = vpop.f32.mrb[0].mxu0
        %v1523 = vpop.f32.mrb[0].mxu0
        %1524 = vmatprep.mubr.bf16.mxu0 0
        %1525 = vmatmul.mubr.bf16.gmra.mrb[0].mxu0 %v1441
        %v1526 = vpop.f32.mrb[0].mxu0
        %v1527 = vadd.f32 0.0, %v1526
        %v1528 = vpop.f32.mrb[0].mxu0
        %v1529 = vpop.f32.mrb[0].mxu0
        %v1530 = vpop.f32.mrb[0].mxu0
        %1531 = vdwg.mxu0
        %v1532 = vadd.f32 %v1317, %v1478
        %v1533 = vadd.f32 %v1318, %v1485
        %v1534 = vadd.f32 %v1319, %v1492
        %v1535 = vadd.f32 %v1320, %v1499
        %v1536 = vadd.f32 %v1321, %v1506
        %v1537 = vadd.f32 %v1322, %v1513
        %v1538 = vadd.f32 %v1323, %v1520
        %v1539 = vadd.f32 %v1324, %v1527
        %v1540 = vld [vmem:[#allocation2 + $0x10] sm:$0x80]
        %v1541 = vld [vmem:[#allocation2 + $0x50] sm:$0xff]
        %s1542 = scalar_lea.vmem [#allocation9], 96
        %v1543 = vld [vmem:[%s1542] sm:$0xf]
        %v1544 = vld [vmem:[%s1542 + $0x4] sm:$0xf]
        %v1545 = vld [vmem:[%s1542 + $0x8] sm:$0xf]
        %v1546 = vld [vmem:[%s1542 + $0xc] sm:$0xf]
        %v1548 = vshrl.u32 %v1540, 16
        %v1550 = vrot.slane %v1548, 7
        %v1551 = vrot.slane %v1351, 7
        %v1552 = vor.u32 %v1551, %v1347
        %v1553 = vsel %vm620, %v1550, %v1552
        %v1554 = vrot.slane %v1359, 7
        %v1555 = vor.u32 %v1554, %v1355
        %v1556 = vsel %vm620, %v1551, %v1555
        %v1557 = vrot.slane %v1367, 7
        %v1558 = vor.u32 %v1557, %v1363
        %v1559 = vsel %vm620, %v1554, %v1558
        %v1560 = vrot.slane %v1375, 7
        %v1561 = vor.u32 %v1560, %v1371
        %v1562 = vsel %vm620, %v1557, %v1561
        %v1563 = vrot.slane %v1383, 7
        %v1564 = vor.u32 %v1563, %v1379
        %v1565 = vsel %vm620, %v1560, %v1564
        %v1566 = vrot.slane %v1391, 7
        %v1567 = vor.u32 %v1566, %v1387
        %v1568 = vsel %vm620, %v1563, %v1567
        %v1569 = vrot.slane %v1399, 7
        %v1570 = vor.u32 %v1569, %v1395
        %v1571 = vsel %vm620, %v1566, %v1570
        %v1573 = vshrl.u32 %v1541, 16
        %v1575 = vrot.slane %v1573, 7
        %v1576 = vshll.u32 %v1541, 16
        %v1578 = vor.u32 %v1575, %v1576
        %v1579 = vsel %vm620, %v1569, %v1578
        %v1584 = vunpack.c.l.b16 %v1543
        %v1585 = vunpack.c.l.b16 %v1544
        %v1586 = vunpack.c.l.b16 %v1545
        %v1587 = vunpack.c.l.b16 %v1546
        %v1588 = vpack.c.b16 %v1585, %v1584
        %v1589 = vpack.c.b16 %v1587, %v1586
        %v1593 = vsel %vm374, %v1553, 0
        %v1596 = vsel %vm374, %v1556, 0
        %v1599 = vsel %vm374, %v1559, 0
        %v1602 = vsel %vm374, %v1562, 0
        %v1605 = vsel %vm374, %v1565, 0
        %v1608 = vsel %vm374, %v1568, 0
        %v1611 = vsel %vm374, %v1571, 0
        %v1614 = vsel %vm374, %v1579, 0
        %1616 = vmatprep.subr.bf16.mxu0 0
        %1617 = vmatpush1.bf16.msra.mxu0 %v1588
        %1618 = vmatprep.subr.bf16.mxu0 0
        %1619 = vmatpush1.bf16.msra.mxu0 %v1589
        %1620 = vmatprep.subr.bf16.mxu0 0
        %1621 = vmatpush1.bf16.msra.mxu0 0
        %1622 = vmatprep.subr.bf16.mxu0 0
        %1623 = vmatpush1.bf16.msra.mxu0 0
        %1624 = vmatprep.subr.bf16.mxu0 0
        %1625 = vmatpush1.bf16.msra.mxu0 0
        %1626 = vmatprep.subr.bf16.mxu0 0
        %1627 = vmatpush1.bf16.msra.mxu0 0
        %1628 = vmatprep.subr.bf16.mxu0 0
        %1629 = vmatpush1.bf16.msra.mxu0 0
        %1630 = vmatprep.subr.bf16.mxu0 0
        %1631 = vmatpush1.bf16.msra.mxu0 0
        %1632 = vmatprep.subr.bf16.mxu0 0
        %1633 = vmatpush1.bf16.msra.mxu0 0
        %1634 = vmatprep.subr.bf16.mxu0 0
        %1635 = vmatpush1.bf16.msra.mxu0 0
        %1636 = vmatprep.subr.bf16.mxu0 0
        %1637 = vmatpush1.bf16.msra.mxu0 0
        %1638 = vmatprep.subr.bf16.mxu0 0
        %1639 = vmatpush1.bf16.msra.mxu0 0
        %1640 = vmatprep.subr.bf16.mxu0 0
        %1641 = vmatpush1.bf16.msra.mxu0 0
        %1642 = vmatprep.subr.bf16.mxu0 0
        %1643 = vmatpush1.bf16.msra.mxu0 0
        %1644 = vmatprep.subr.bf16.mxu0 0
        %1645 = vmatpush1.bf16.msra.mxu0 0
        %1646 = vmatprep.subr.bf16.mxu0 0
        %1647 = vmatpush1.bf16.msra.mxu0 0
        %1648 = vmatprep.mubr.bf16.mxu0 0
        %1649 = vmatmul.mubr.bf16.gmra.mrb[0].mxu0 %v1593
        %v1650 = vpop.f32.mrb[0].mxu0
        %v1651 = vadd.f32 0.0, %v1650
        %v1652 = vpop.f32.mrb[0].mxu0
        %v1653 = vpop.f32.mrb[0].mxu0
        %v1654 = vpop.f32.mrb[0].mxu0
        %1655 = vmatprep.mubr.bf16.mxu0 0
        %1656 = vmatmul.mubr.bf16.gmra.mrb[0].mxu0 %v1596
        %v1657 = vpop.f32.mrb[0].mxu0
        %v1658 = vadd.f32 0.0, %v1657
        %v1659 = vpop.f32.mrb[0].mxu0
        %v1660 = vpop.f32.mrb[0].mxu0
        %v1661 = vpop.f32.mrb[0].mxu0
        %1662 = vmatprep.mubr.bf16.mxu0 0
        %1663 = vmatmul.mubr.bf16.gmra.mrb[0].mxu0 %v1599
        %v1664 = vpop.f32.mrb[0].mxu0
        %v1665 = vadd.f32 0.0, %v1664
        %v1666 = vpop.f32.mrb[0].mxu0
        %v1667 = vpop.f32.mrb[0].mxu0
        %v1668 = vpop.f32.mrb[0].mxu0
        %1669 = vmatprep.mubr.bf16.mxu0 0
        %1670 = vmatmul.mubr.bf16.gmra.mrb[0].mxu0 %v1602
        %v1671 = vpop.f32.mrb[0].mxu0
        %v1672 = vadd.f32 0.0, %v1671
        %v1673 = vpop.f32.mrb[0].mxu0
        %v1674 = vpop.f32.mrb[0].mxu0
        %v1675 = vpop.f32.mrb[0].mxu0
        %1676 = vmatprep.mubr.bf16.mxu0 0
        %1677 = vmatmul.mubr.bf16.gmra.mrb[0].mxu0 %v1605
        %v1678 = vpop.f32.mrb[0].mxu0
        %v1679 = vadd.f32 0.0, %v1678
        %v1680 = vpop.f32.mrb[0].mxu0
        %v1681 = vpop.f32.mrb[0].mxu0
        %v1682 = vpop.f32.mrb[0].mxu0
        %1683 = vmatprep.mubr.bf16.mxu0 0
        %1684 = vmatmul.mubr.bf16.gmra.mrb[0].mxu0 %v1608
        %v1685 = vpop.f32.mrb[0].mxu0
        %v1686 = vadd.f32 0.0, %v1685
        %v1687 = vpop.f32.mrb[0].mxu0
        %v1688 = vpop.f32.mrb[0].mxu0
        %v1689 = vpop.f32.mrb[0].mxu0
        %1690 = vmatprep.mubr.bf16.mxu0 0
        %1691 = vmatmul.mubr.bf16.gmra.mrb[0].mxu0 %v1611
        %v1692 = vpop.f32.mrb[0].mxu0
        %v1693 = vadd.f32 0.0, %v1692
        %v1694 = vpop.f32.mrb[0].mxu0
        %v1695 = vpop.f32.mrb[0].mxu0
        %v1696 = vpop.f32.mrb[0].mxu0
        %1697 = vmatprep.mubr.bf16.mxu0 0
        %1698 = vmatmul.mubr.bf16.gmra.mrb[0].mxu0 %v1614
        %v1699 = vpop.f32.mrb[0].mxu0
        %v1700 = vadd.f32 0.0, %v1699
        %v1701 = vpop.f32.mrb[0].mxu0
        %v1702 = vpop.f32.mrb[0].mxu0
        %v1703 = vpop.f32.mrb[0].mxu0
        %1704 = vdwg.mxu0
        %v1705 = vadd.f32 %v1532, %v1651
        %v1706 = vadd.f32 %v1533, %v1658
        %v1707 = vadd.f32 %v1534, %v1665
        %v1708 = vadd.f32 %v1535, %v1672
        %v1709 = vadd.f32 %v1536, %v1679
        %v1710 = vadd.f32 %v1537, %v1686
        %v1711 = vadd.f32 %v1538, %v1693
        %v1712 = vadd.f32 %v1539, %v1700
        %s1713 = scalar_lea.vmem [#allocation9], 112
        %v1714 = vld [vmem:[%s1713] sm:$0xf]
        %v1715 = vld [vmem:[%s1713 + $0x4] sm:$0xf]
        %v1716 = vld [vmem:[%s1713 + $0x8] sm:$0xf]
        %v1717 = vld [vmem:[%s1713 + $0xc] sm:$0xf]
        %v1722 = vunpack.c.l.b16 %v1714
        %v1723 = vunpack.c.l.b16 %v1715
        %v1724 = vunpack.c.l.b16 %v1716
        %v1725 = vunpack.c.l.b16 %v1717
        %v1726 = vpack.c.b16 %v1723, %v1722
        %v1727 = vpack.c.b16 %v1725, %v1724
        %v1730 = vsel %vm374, %v1326, 0
        %v1732 = vsel %vm374, %v1327, 0
        %v1734 = vsel %vm374, %v1328, 0
        %v1736 = vsel %vm374, %v1329, 0
        %v1738 = vsel %vm374, %v1330, 0
        %v1740 = vsel %vm374, %v1331, 0
        %v1742 = vsel %vm374, %v1332, 0
        %v1744 = vsel %vm374, %v1541, 0
        %1746 = vmatprep.subr.bf16.mxu0 0
        %1747 = vmatpush1.bf16.msra.mxu0 %v1726
        %1748 = vmatprep.subr.bf16.mxu0 0
        %1749 = vmatpush1.bf16.msra.mxu0 %v1727
        %1750 = vmatprep.subr.bf16.mxu0 0
        %1751 = vmatpush1.bf16.msra.mxu0 0
        %1752 = vmatprep.subr.bf16.mxu0 0
        %1753 = vmatpush1.bf16.msra.mxu0 0
        %1754 = vmatprep.subr.bf16.mxu0 0
        %1755 = vmatpush1.bf16.msra.mxu0 0
        %1756 = vmatprep.subr.bf16.mxu0 0
        %1757 = vmatpush1.bf16.msra.mxu0 0
        %1758 = vmatprep.subr.bf16.mxu0 0
        %1759 = vmatpush1.bf16.msra.mxu0 0
        %1760 = vmatprep.subr.bf16.mxu0 0
        %1761 = vmatpush1.bf16.msra.mxu0 0
        %1762 = vmatprep.subr.bf16.mxu0 0
        %1763 = vmatpush1.bf16.msra.mxu0 0
        %1764 = vmatprep.subr.bf16.mxu0 0
        %1765 = vmatpush1.bf16.msra.mxu0 0
        %1766 = vmatprep.subr.bf16.mxu0 0
        %1767 = vmatpush1.bf16.msra.mxu0 0
        %1768 = vmatprep.subr.bf16.mxu0 0
        %1769 = vmatpush1.bf16.msra.mxu0 0
        %1770 = vmatprep.subr.bf16.mxu0 0
        %1771 = vmatpush1.bf16.msra.mxu0 0
        %1772 = vmatprep.subr.bf16.mxu0 0
        %1773 = vmatpush1.bf16.msra.mxu0 0
        %1774 = vmatprep.subr.bf16.mxu0 0
        %1775 = vmatpush1.bf16.msra.mxu0 0
        %1776 = vmatprep.subr.bf16.mxu0 0
        %1777 = vmatpush1.bf16.msra.mxu0 0
        %1778 = vmatprep.mubr.bf16.mxu0 0
        %1779 = vmatmul.mubr.bf16.gmra.mrb[0].mxu0 %v1730
        %v1780 = vpop.f32.mrb[0].mxu0
        %v1781 = vadd.f32 0.0, %v1780
        %v1782 = vpop.f32.mrb[0].mxu0
        %v1783 = vpop.f32.mrb[0].mxu0
        %v1784 = vpop.f32.mrb[0].mxu0
        %1785 = vmatprep.mubr.bf16.mxu0 0
        %1786 = vmatmul.mubr.bf16.gmra.mrb[0].mxu0 %v1732
        %v1787 = vpop.f32.mrb[0].mxu0
        %v1788 = vadd.f32 0.0, %v1787
        %v1789 = vpop.f32.mrb[0].mxu0
        %v1790 = vpop.f32.mrb[0].mxu0
        %v1791 = vpop.f32.mrb[0].mxu0
        %1792 = vmatprep.mubr.bf16.mxu0 0
        %1793 = vmatmul.mubr.bf16.gmra.mrb[0].mxu0 %v1734
        %v1794 = vpop.f32.mrb[0].mxu0
        %v1795 = vadd.f32 0.0, %v1794
        %v1796 = vpop.f32.mrb[0].mxu0
        %v1797 = vpop.f32.mrb[0].mxu0
        %v1798 = vpop.f32.mrb[0].mxu0
        %1799 = vmatprep.mubr.bf16.mxu0 0
        %1800 = vmatmul.mubr.bf16.gmra.mrb[0].mxu0 %v1736
        %v1801 = vpop.f32.mrb[0].mxu0
        %v1802 = vadd.f32 0.0, %v1801
        %v1803 = vpop.f32.mrb[0].mxu0
        %v1804 = vpop.f32.mrb[0].mxu0
        %v1805 = vpop.f32.mrb[0].mxu0
        %1806 = vmatprep.mubr.bf16.mxu0 0
        %1807 = vmatmul.mubr.bf16.gmra.mrb[0].mxu0 %v1738
        %v1808 = vpop.f32.mrb[0].mxu0
        %v1809 = vadd.f32 0.0, %v1808
        %v1810 = vpop.f32.mrb[0].mxu0
        %v1811 = vpop.f32.mrb[0].mxu0
        %v1812 = vpop.f32.mrb[0].mxu0
        %1813 = vmatprep.mubr.bf16.mxu0 0
        %1814 = vmatmul.mubr.bf16.gmra.mrb[0].mxu0 %v1740
        %v1815 = vpop.f32.mrb[0].mxu0
        %v1816 = vadd.f32 0.0, %v1815
        %v1817 = vpop.f32.mrb[0].mxu0
        %v1818 = vpop.f32.mrb[0].mxu0
        %v1819 = vpop.f32.mrb[0].mxu0
        %1820 = vmatprep.mubr.bf16.mxu0 0
        %1821 = vmatmul.mubr.bf16.gmra.mrb[0].mxu0 %v1742
        %v1822 = vpop.f32.mrb[0].mxu0
        %v1823 = vadd.f32 0.0, %v1822
        %v1824 = vpop.f32.mrb[0].mxu0
        %v1825 = vpop.f32.mrb[0].mxu0
        %v1826 = vpop.f32.mrb[0].mxu0
        %1827 = vmatprep.mubr.bf16.mxu0 0
        %1828 = vmatmul.mubr.bf16.gmra.mrb[0].mxu0 %v1744
        %v1829 = vpop.f32.mrb[0].mxu0
        %v1830 = vadd.f32 0.0, %v1829
        %v1831 = vpop.f32.mrb[0].mxu0
        %v1832 = vpop.f32.mrb[0].mxu0
        %v1833 = vpop.f32.mrb[0].mxu0
        %1834 = vdwg.mxu0
        %v1835 = vadd.f32 %v1705, %v1781
        %v1836 = vadd.f32 %v1706, %v1788
        %v1837 = vadd.f32 %v1707, %v1795
        %v1838 = vadd.f32 %v1708, %v1802
        %v1839 = vadd.f32 %v1709, %v1809
        %v1840 = vadd.f32 %v1710, %v1816
        %v1841 = vadd.f32 %v1711, %v1823
        %v1842 = vadd.f32 %v1712, %v1830
        %v1843 = vld [vmem:[#allocation2 + $0x18] sm:$0xff]
        %v1844 = vld [vmem:[#allocation2 + $0x20] sm:$0xff]
        %v1845 = vld [vmem:[#allocation2 + $0x28] sm:$0xff]
        %v1846 = vld [vmem:[#allocation2 + $0x30] sm:$0xff]
        %v1847 = vld [vmem:[#allocation2 + $0x38] sm:$0xff]
        %v1848 = vld [vmem:[#allocation2 + $0x40] sm:$0xff]
        %v1849 = vld [vmem:[#allocation2 + $0x48] sm:$0xff]
        %v1850 = vld [vmem:[#allocation2 + $0x50] sm:$0xff]
        %v1851 = vld [vmem:[#allocation2 + $0x58] sm:$0x1]
        %s1852 = scalar_lea.vmem [#allocation9], 128
        %v1853 = vld [vmem:[%s1852] sm:$0xf]
        %v1854 = vld [vmem:[%s1852 + $0x4] sm:$0xf]
        %v1855 = vld [vmem:[%s1852 + $0x8] sm:$0xf]
        %v1856 = vld [vmem:[%s1852 + $0xc] sm:$0xf]
        %v1858 = vshrl.u32 %v1843, 16
        %v1860 = vshll.u32 %v1843, 16
        %v1862 = vrot.slane %v1860, 1
        %v1863 = vor.u32 %v1858, %v1862
        %v1865 = vshll.u32 %v1844, 16
        %v1867 = vrot.slane %v1865, 1
        %v1868 = vsel %vm820, %v1863, %v1867
        %v1869 = vshrl.u32 %v1844, 16
        %v1871 = vor.u32 %v1869, %v1867
        %v1873 = vshll.u32 %v1845, 16
        %v1875 = vrot.slane %v1873, 1
        %v1876 = vsel %vm820, %v1871, %v1875
        %v1877 = vshrl.u32 %v1845, 16
        %v1879 = vor.u32 %v1877, %v1875
        %v1881 = vshll.u32 %v1846, 16
        %v1883 = vrot.slane %v1881, 1
        %v1884 = vsel %vm820, %v1879, %v1883
        %v1885 = vshrl.u32 %v1846, 16
        %v1887 = vor.u32 %v1885, %v1883
        %v1889 = vshll.u32 %v1847, 16
        %v1891 = vrot.slane %v1889, 1
        %v1892 = vsel %vm820, %v1887, %v1891
        %v1893 = vshrl.u32 %v1847, 16
        %v1895 = vor.u32 %v1893, %v1891
        %v1897 = vshll.u32 %v1848, 16
        %v1899 = vrot.slane %v1897, 1
        %v1900 = vsel %vm820, %v1895, %v1899
        %v1901 = vshrl.u32 %v1848, 16
        %v1903 = vor.u32 %v1901, %v1899
        %v1905 = vshll.u32 %v1849, 16
        %v1907 = vrot.slane %v1905, 1
        %v1908 = vsel %vm820, %v1903, %v1907
        %v1909 = vshrl.u32 %v1849, 16
        %v1911 = vor.u32 %v1909, %v1907
        %v1913 = vshll.u32 %v1850, 16
        %v1915 = vrot.slane %v1913, 1
        %v1916 = vsel %vm820, %v1911, %v1915
        %v1917 = vshrl.u32 %v1850, 16
        %v1919 = vor.u32 %v1917, %v1915
        %v1921 = vshll.u32 %v1851, 16
        %v1923 = vrot.slane %v1921, 1
        %v1924 = vsel %vm820, %v1919, %v1923
        %v1929 = vunpack.c.l.b16 %v1853
        %v1930 = vunpack.c.l.b16 %v1854
        %v1931 = vunpack.c.l.b16 %v1855
        %v1932 = vunpack.c.l.b16 %v1856
        %v1933 = vpack.c.b16 %v1930, %v1929
        %v1934 = vpack.c.b16 %v1932, %v1931
        %v1938 = vsel %vm374, %v1868, 0
        %v1941 = vsel %vm374, %v1876, 0
        %v1944 = vsel %vm374, %v1884, 0
        %v1947 = vsel %vm374, %v1892, 0
        %v1950 = vsel %vm374, %v1900, 0
        %v1953 = vsel %vm374, %v1908, 0
        %v1956 = vsel %vm374, %v1916, 0
        %v1959 = vsel %vm374, %v1924, 0
        %1961 = vmatprep.subr.bf16.mxu0 0
        %1962 = vmatpush1.bf16.msra.mxu0 %v1933
        %1963 = vmatprep.subr.bf16.mxu0 0
        %1964 = vmatpush1.bf16.msra.mxu0 %v1934
        %1965 = vmatprep.subr.bf16.mxu0 0
        %1966 = vmatpush1.bf16.msra.mxu0 0
        %1967 = vmatprep.subr.bf16.mxu0 0
        %1968 = vmatpush1.bf16.msra.mxu0 0
        %1969 = vmatprep.subr.bf16.mxu0 0
        %1970 = vmatpush1.bf16.msra.mxu0 0
        %1971 = vmatprep.subr.bf16.mxu0 0
        %1972 = vmatpush1.bf16.msra.mxu0 0
        %1973 = vmatprep.subr.bf16.mxu0 0
        %1974 = vmatpush1.bf16.msra.mxu0 0
        %1975 = vmatprep.subr.bf16.mxu0 0
        %1976 = vmatpush1.bf16.msra.mxu0 0
        %1977 = vmatprep.subr.bf16.mxu0 0
        %1978 = vmatpush1.bf16.msra.mxu0 0
        %1979 = vmatprep.subr.bf16.mxu0 0
        %1980 = vmatpush1.bf16.msra.mxu0 0
        %1981 = vmatprep.subr.bf16.mxu0 0
        %1982 = vmatpush1.bf16.msra.mxu0 0
        %1983 = vmatprep.subr.bf16.mxu0 0
        %1984 = vmatpush1.bf16.msra.mxu0 0
        %1985 = vmatprep.subr.bf16.mxu0 0
        %1986 = vmatpush1.bf16.msra.mxu0 0
        %1987 = vmatprep.subr.bf16.mxu0 0
        %1988 = vmatpush1.bf16.msra.mxu0 0
        %1989 = vmatprep.subr.bf16.mxu0 0
        %1990 = vmatpush1.bf16.msra.mxu0 0
        %1991 = vmatprep.subr.bf16.mxu0 0
        %1992 = vmatpush1.bf16.msra.mxu0 0
        %1993 = vmatprep.mubr.bf16.mxu0 0
        %1994 = vmatmul.mubr.bf16.gmra.mrb[0].mxu0 %v1938
        %v1995 = vpop.f32.mrb[0].mxu0
        %v1996 = vadd.f32 0.0, %v1995
        %v1997 = vpop.f32.mrb[0].mxu0
        %v1998 = vpop.f32.mrb[0].mxu0
        %v1999 = vpop.f32.mrb[0].mxu0
        %2000 = vmatprep.mubr.bf16.mxu0 0
        %2001 = vmatmul.mubr.bf16.gmra.mrb[0].mxu0 %v1941
        %v2002 = vpop.f32.mrb[0].mxu0
        %v2003 = vadd.f32 0.0, %v2002
        %v2004 = vpop.f32.mrb[0].mxu0
        %v2005 = vpop.f32.mrb[0].mxu0
        %v2006 = vpop.f32.mrb[0].mxu0
        %2007 = vmatprep.mubr.bf16.mxu0 0
        %2008 = vmatmul.mubr.bf16.gmra.mrb[0].mxu0 %v1944
        %v2009 = vpop.f32.mrb[0].mxu0
        %v2010 = vadd.f32 0.0, %v2009
        %v2011 = vpop.f32.mrb[0].mxu0
        %v2012 = vpop.f32.mrb[0].mxu0
        %v2013 = vpop.f32.mrb[0].mxu0
        %2014 = vmatprep.mubr.bf16.mxu0 0
        %2015 = vmatmul.mubr.bf16.gmra.mrb[0].mxu0 %v1947
        %v2016 = vpop.f32.mrb[0].mxu0
        %v2017 = vadd.f32 0.0, %v2016
        %v2018 = vpop.f32.mrb[0].mxu0
        %v2019 = vpop.f32.mrb[0].mxu0
        %v2020 = vpop.f32.mrb[0].mxu0
        %2021 = vmatprep.mubr.bf16.mxu0 0
        %2022 = vmatmul.mubr.bf16.gmra.mrb[0].mxu0 %v1950
        %v2023 = vpop.f32.mrb[0].mxu0
        %v2024 = vadd.f32 0.0, %v2023
        %v2025 = vpop.f32.mrb[0].mxu0
        %v2026 = vpop.f32.mrb[0].mxu0
        %v2027 = vpop.f32.mrb[0].mxu0
        %2028 = vmatprep.mubr.bf16.mxu0 0
        %2029 = vmatmul.mubr.bf16.gmra.mrb[0].mxu0 %v1953
        %v2030 = vpop.f32.mrb[0].mxu0
        %v2031 = vadd.f32 0.0, %v2030
        %v2032 = vpop.f32.mrb[0].mxu0
        %v2033 = vpop.f32.mrb[0].mxu0
        %v2034 = vpop.f32.mrb[0].mxu0
        %2035 = vmatprep.mubr.bf16.mxu0 0
        %2036 = vmatmul.mubr.bf16.gmra.mrb[0].mxu0 %v1956
        %v2037 = vpop.f32.mrb[0].mxu0
        %v2038 = vadd.f32 0.0, %v2037
        %v2039 = vpop.f32.mrb[0].mxu0
        %v2040 = vpop.f32.mrb[0].mxu0
        %v2041 = vpop.f32.mrb[0].mxu0
        %2042 = vmatprep.mubr.bf16.mxu0 0
        %2043 = vmatmul.mubr.bf16.gmra.mrb[0].mxu0 %v1959
        %v2044 = vpop.f32.mrb[0].mxu0
        %v2045 = vadd.f32 0.0, %v2044
        %v2046 = vpop.f32.mrb[0].mxu0
        %v2047 = vpop.f32.mrb[0].mxu0
        %v2048 = vpop.f32.mrb[0].mxu0
        %2049 = vdwg.mxu0
        %v2050 = vadd.f32 %v1835, %v1996
        %v2051 = vadd.f32 %v1836, %v2003
        %v2052 = vadd.f32 %v1837, %v2010
        %v2053 = vadd.f32 %v1838, %v2017
        %v2054 = vadd.f32 %v1839, %v2024
        %v2055 = vadd.f32 %v1840, %v2031
        %v2056 = vadd.f32 %v1841, %v2038
        %v2057 = vadd.f32 %v1842, %v2045
        %v2058 = vld [vmem:[%s4] sm:$0x1]
        %v2060 = vlaneseq
        %v2061 = vshrl.u32 %v2060, 7
        %v2062 = vsub.s32 0, %v2061
        %v2063 = vrot.slane %v2058, %v2062
        %v2065 = vadd.f32 %v2050, %v2063
        %v2066 = vadd.f32 %v2051, %v2063
        %v2067 = vadd.f32 %v2052, %v2063
        %v2068 = vadd.f32 %v2053, %v2063
        %v2069 = vadd.f32 %v2054, %v2063
        %v2070 = vadd.f32 %v2055, %v2063
        %v2071 = vadd.f32 %v2056, %v2063
        %v2072 = vadd.f32 %v2057, %v2063
        %v2073 = vpack.c.bf16 %v2065, %v2065
        %v2074 = vpack.c.bf16 %v2066, %v2066
        %v2075 = vpack.c.bf16 %v2067, %v2067
        %v2076 = vpack.c.bf16 %v2068, %v2068
        %v2077 = vpack.c.bf16 %v2069, %v2069
        %v2078 = vpack.c.bf16 %v2070, %v2070
        %v2079 = vpack.c.bf16 %v2071, %v2071
        %v2080 = vpack.c.bf16 %v2072, %v2072
        %vm2081 = vcmask 257024
        %2082 = vst.msk [vmem:[%s365] sm:$0xf] %vm2081, %v2073
        %2083 = vst.msk [vmem:[%s365 + $0x4] sm:$0xf] %vm2081, %v2074
        %2084 = vst.msk [vmem:[%s365 + $0x8] sm:$0xf] %vm2081, %v2075
        %2085 = vst.msk [vmem:[%s365 + $0xc] sm:$0xf] %vm2081, %v2076
        %2086 = vst.msk [vmem:[%s365 + $0x10] sm:$0xf] %vm2081, %v2077
        %2087 = vst.msk [vmem:[%s365 + $0x14] sm:$0xf] %vm2081, %v2078
        %2088 = vst.msk [vmem:[%s365 + $0x18] sm:$0xf] %vm2081, %v2079
        %2089 = vst.msk [vmem:[%s365 + $0x1c] sm:$0xf] %vm2081, %v2080
        %v2090 = vld [vmem:[%s316] sm:$0xff]
        %v2091 = vld [vmem:[%s316 + $0x8] sm:$0xff]
        %v2092 = vld [vmem:[%s316 + $0x10] sm:$0xff]
        %v2093 = vld [vmem:[%s316 + $0x18] sm:$0xff]
        %v2094 = vld [vmem:[%s316 + $0x20] sm:$0xff]
        %v2095 = vld [vmem:[%s316 + $0x28] sm:$0xff]
        %v2096 = vld [vmem:[%s316 + $0x30] sm:$0xff]
        %v2097 = vld [vmem:[%s316 + $0x38] sm:$0xff]
        %v2098 = vadd.f32 %v2065, %v2090
        %v2099 = vadd.f32 %v2066, %v2091
        %v2100 = vadd.f32 %v2067, %v2092
        %v2101 = vadd.f32 %v2068, %v2093
        %v2102 = vadd.f32 %v2069, %v2094
        %v2103 = vadd.f32 %v2070, %v2095
        %v2104 = vadd.f32 %v2071, %v2096
        %v2105 = vadd.f32 %v2072, %v2097
        %2106 = vst.msk [vmem:[%s372] sm:$0xff] %vm374, %v2098
        %2107 = vst.msk [vmem:[%s372 + $0x8] sm:$0xff] %vm374, %v2099
        %2108 = vst.msk [vmem:[%s372 + $0x10] sm:$0xff] %vm374, %v2100
        %2109 = vst.msk [vmem:[%s372 + $0x18] sm:$0xff] %vm374, %v2101
        %2110 = vst.msk [vmem:[%s372 + $0x20] sm:$0xff] %vm374, %v2102
        %2111 = vst.msk [vmem:[%s372 + $0x28] sm:$0xff] %vm374, %v2103
        %2112 = vst.msk [vmem:[%s372 + $0x30] sm:$0xff] %vm374, %v2104
        %2113 = vst.msk [vmem:[%s372 + $0x38] sm:$0xff] %vm374, %v2105
        %s2114 = sand.u32 %s159, 1
        %s2115 = scalar_lea.sflag [#allocation5], %s2114
        %s2116 = sand.u32 %s159, 1
        %s2117 = smul.addr %s2116, 32
        %s2118 = scalar_lea.vmem [#allocation11], %s2117
        %s2119 = sand.u32 %s185, 1
        %s2120 = scalar_lea.sflag [#allocation13], %s2119
        %s2121 = sand.u32 %s185, 1
        %s2122 = smul.addr %s2121, 64
        %s2123 = scalar_lea.vmem [#allocation12], %s2122
        // Predicated region
        $region57: #{tpu_custom_call.1} parent=39 // pred_check
          %p2124 = pneg %p169
        $region58: #{tpu_custom_call.1} parent=39 // pred_check_branch
          %2126 = sbr.rel (%p2124) target = $region60
        $region59: #{tpu_custom_call.1} parent=39 // pred_region
          %s2128 = ssub.s32 512, 512
          %2129 = vsyncadd %s2115, %s2128
          %s2130 = smul.addr %s31, 8
          %s2131 = smul.addr %s2130, 64
          %s2132 = scalar_lea.hbm %s5, %s2131
          %s2133 = sshll.u32 %s2118, 4
          %s2134 = int_to_ptr.vmem [resolvable:$true] %s2133
          %2139 = dma.vmem_to_hbm [thread:$0]  %s2134, 512, %s2132, %s2115, 64, 64, 4
        $region60: #{tpu_custom_call.1} parent=39 // pred_fallthru
          _
        // Predicated region
        $region61: #{tpu_custom_call.1} parent=39 // pred_check
          %p2140 = pneg %p195
        $region62: #{tpu_custom_call.1} parent=39 // pred_check_branch
          %2142 = sbr.rel (%p2140) target = $region64
        $region63: #{tpu_custom_call.1} parent=39 // pred_region
          %s2144 = ssub.s32 1024, 1024
          %2145 = vsyncadd %s2120, %s2144
          %s2146 = smul.addr %s31, 8
          %s2147 = smul.addr %s2146, 128
          %s2148 = scalar_lea.hbm %s6, %s2147
          %s2149 = sshll.u32 %s2123, 4
          %s2150 = int_to_ptr.vmem [resolvable:$true] %s2149
          %2155 = dma.vmem_to_hbm [thread:$0]  %s2150, 1024, %s2148, %s2120, 128, 128, 8
        $region64: #{tpu_custom_call.1} parent=39 // pred_fallthru
          _
      $region40: #{tpu_custom_call.1} parent=5 // pred_fallthru
        _
      %p2156 = scmp.le.s32.totalorder 2, %s26
      // Predicated region
      $region65: #{tpu_custom_call.1} parent=5 // pred_check
        %p2157 = pneg %p2156
      $region66: #{tpu_custom_call.1} parent=5 // pred_check_branch
        %2159 = sbr.rel (%p2157) target = $region68
      $region67: #{tpu_custom_call.1} parent=5 // pred_region
        %s2160 = ssub.s32 %s26, 2
        // Predicated region
        $region69: #{tpu_custom_call.1} parent=67 // pred_check
          %p2161 = pneg %p175
        $region70: #{tpu_custom_call.1} parent=67 // pred_check_branch
          %2163 = sbr.rel (%p2161) target = $region72
        $region71: #{tpu_custom_call.1} parent=67 // pred_region
          %s2164 = sand.u32 %s160, 1
          %s2165 = scalar_lea.sflag [#allocation5], %s2164
          %s2166 = sand.u32 %s160, 1
          %s2167 = smul.addr %s2166, 32
          %s2168 = scalar_lea.vmem [#allocation11], %s2167
          %2169 = dma.done %s2165, 512
        $region72: #{tpu_custom_call.1} parent=67 // pred_fallthru
          _
        // Predicated region
        $region73: #{tpu_custom_call.1} parent=67 // pred_check
          %p2170 = pneg %p201
        $region74: #{tpu_custom_call.1} parent=67 // pred_check_branch
          %2172 = sbr.rel (%p2170) target = $region76
        $region75: #{tpu_custom_call.1} parent=67 // pred_region
          %s2173 = sand.u32 %s186, 1
          %s2174 = scalar_lea.sflag [#allocation13], %s2173
          %s2175 = sand.u32 %s186, 1
          %s2176 = smul.addr %s2175, 64
          %s2177 = scalar_lea.vmem [#allocation12], %s2176
          %2178 = dma.done %s2174, 1024
        $region76: #{tpu_custom_call.1} parent=67 // pred_fallthru
          _
      $region68: #{tpu_custom_call.1} parent=5 // pred_fallthru
        _
    $region6: #{tpu_custom_call.1} parent=1 // loop_footer
      %s30 = sadd.s32 1, %s26
    $region7: #{tpu_custom_call.1} parent=1 // loop_footer_branch
      %25 = sbr.rel target = $region3
    $region8: #{tpu_custom_call.1} parent=1 // loop_exit
      _
    %2179 = vsyncpa [#allocation4], 1
    %s2180 = scalar_lea.sflag [#allocation4], 1
    %2181 = vsyncpa %s2180, 1
    %2182 = vsyncpa [#allocation7], 1
    %s2183 = scalar_lea.sflag [#allocation7], 1
    %2184 = vsyncpa %s2183, 1
    %2185 = vsyncpa [#allocation10], 1
    %2186 = vsyncpa [#allocation5], 1
    %s2187 = scalar_lea.sflag [#allocation5], 1
    %2188 = vsyncpa %s2187, 1
    %2189 = vsyncpa [#allocation13], 1
    %s2190 = scalar_lea.sflag [#allocation13], 1
    %2191 = vsyncpa %s2190, 1

</llo_original>
